<compile_context>
chip_gen: v7x
topology: tpu7x:2x2x1
jax: 0.10.0
libtpu: 0.0.40
codegen_flags: <defaults>
</compile_context>

<pallas_src>
import functools

import jax
import jax.numpy as jnp
import numpy as np
from jax.experimental import pallas as pl
from jax.experimental.pallas import tpu as pltpu


def _round_up(x, m):
    return (x + m - 1) // m * m


# ----------------------------------------------------------------------------
# Fused DualNetMarket forward kernel
# ----------------------------------------------------------------------------
def dualnet_kernel(
    x_ref,        # (T*B, D)   time-major flattened input (batch padded to B)
    s_wih_ref,    # (D, 4H)    slow input weights   (g cols pre-scaled x2)
    s_b_ref,      # (1, 4H)    slow bias            (g cols pre-scaled x2)
    s_whh_ref,    # (H, 4H)    slow recurrent       (g cols pre-scaled x2)
    feat_w_ref,   # (H, H)     slow feature projection
    feat_b_ref,   # (1, H)
    f_wih_ref,    # (D, 4H)    fast input weights   (g cols pre-scaled x2)
    f_b_ref,      # (1, 4H)
    f_whh_ref,    # (H, 4H)    fast recurrent       (g cols pre-scaled x2)
    head_w_ref,   # (H, OCp)   head weights (columns zero-padded to 128 lanes)
    head_b_ref,   # (1, OCp)
    out_ref,      # (B, OCp)
    xw_s_ref,     # VMEM scratch (T*B, 4H): slow-learner input projection
    xw_f_ref,     # VMEM scratch (T*B, 4H): fast-learner input projection
    *, T, B, H,
):
    H4 = 4 * H
    x = x_ref[...]

    # --- hoisted, per-learner input projections (bias folded); the fast half is
    # independent of the slow recurrence so the scheduler can overlap it. ---
    xw_s_ref[...] = (
        jnp.dot(x, s_wih_ref[...], preferred_element_type=jnp.float32) + s_b_ref[...]
    )
    xw_f_ref[...] = (
        jnp.dot(x, f_wih_ref[...], preferred_element_type=jnp.float32) + f_b_ref[...]
    )

    def lstm(xw_ref, w_hh, h_mod=None):
        """LSTM recurrence; only h @ W_hh + one sigmoid + one tanh(c) per step."""
        h = jnp.zeros((B, H), jnp.float32)
        c = jnp.zeros((B, H), jnp.float32)
        # T is small & static: full Python unroll (single basic block, cross-step view).
        for t in range(T):
            g_x = xw_ref[pl.ds(t * B, B), :]             # aligned (B, 4H) load from scratch
            gates = g_x + jnp.dot(h, w_hh, preferred_element_type=jnp.float32)
            # Single full-width EUP pass. g columns were pre-scaled by 2 at pack time,
            # so tanh(g_orig) == 2*sigmoid(2*g_orig) - 1 comes from the same sigmoid.
            sig = jax.nn.sigmoid(gates)
            i = sig[:, 0 * H:1 * H]
            f = sig[:, 1 * H:2 * H]
            g = 2.0 * sig[:, 2 * H:3 * H] - 1.0
            o = sig[:, 3 * H:4 * H]
            c = f * c + i * g
            h = o * jnp.tanh(c)
            if h_mod is not None:
                # DualNet: slow-learner features multiplicatively modulate fast features.
                h = h * h_mod
        return h

    # --- SlowLearner (return_feat=True): LSTM over stock, project final hidden ---
    h_slow = lstm(xw_s_ref, s_whh_ref[...])
    feat = jnp.tanh(
        jnp.dot(h_slow, feat_w_ref[...], preferred_element_type=jnp.float32)
        + feat_b_ref[...]
    )  # (B, H)

    # --- FastLearner: LSTM over stock, modulated by slow features ---
    mod = jax.nn.sigmoid(feat)
    h_fast = lstm(xw_f_ref, f_whh_ref[...], h_mod=mod)

    # --- classification head (lane-dense (B, OCp) store) ---
    out_ref[...] = (
        jnp.dot(h_fast, head_w_ref[...], preferred_element_type=jnp.float32)
        + head_b_ref[...]
    )


# ----------------------------------------------------------------------------
# One-time parameter packing (hoisted out of the per-call path)
# ----------------------------------------------------------------------------
def pack_params(params):
    """Pack / pre-scale parameters once. Do NOT call this per forward step."""
    H = params["s_whh"].shape[0]
    OC = params["head_w"].shape[1]
    OCp = _round_up(OC, 128)

    def scale_g(w):
        # tanh-via-sigmoid identity: scale ONLY the g-gate columns [2H:3H) by 2.
        w = jnp.asarray(w, jnp.float32)
        return w.at[..., 2 * H:3 * H].multiply(2.0)

    head_w = jnp.zeros((H, OCp), jnp.float32).at[:, :OC].set(
        jnp.asarray(params["head_w"], jnp.float32))
    head_b = jnp.zeros((1, OCp), jnp.float32).at[:, :OC].set(
        jnp.asarray(params["head_b"], jnp.float32))

    return {
        "s_wih": scale_g(params["s_wih"]),
        "s_b":   scale_g(params["s_b"]),
        "s_whh": scale_g(params["s_whh"]),
        "feat_w": jnp.asarray(params["feat_w"], jnp.float32),
        "feat_b": jnp.asarray(params["feat_b"], jnp.float32),
        "f_wih": scale_g(params["f_wih"]),
        "f_b":   scale_g(params["f_b"]),
        "f_whh": scale_g(params["f_whh"]),
        "head_w": head_w,
        "head_b": head_b,
    }


# ----------------------------------------------------------------------------
# Per-call wrapper (only x pad / transpose / reshape happens here)
# ----------------------------------------------------------------------------
@functools.partial(jax.jit, static_argnames=("out_dim", "n_class"))
def dualnet_market_forward(stock, packed, *, out_dim, n_class):
    """stock: (B, T, D) float32, packed: output of pack_params -> (B, out_dim, n_class)."""
    B, T, D = stock.shape
    H = packed["s_whh"].shape[0]
    OC = out_dim * n_class
    OCp = packed["head_w"].shape[1]
    Bp = _round_up(B, 8)        # sublane-dense batch

    # Pad batch, go time-major, flatten (T, Bp, D) -> (T*Bp, D).
    xp = jnp.zeros((Bp, T, D), jnp.float32).at[:B].set(stock.astype(jnp.float32))
    x_2d = jnp.transpose(xp, (1, 0, 2)).reshape(T * Bp, D)

    kernel = functools.partial(dualnet_kernel, T=T, B=Bp, H=H)
    vmem = pl.BlockSpec(memory_space=pltpu.MemorySpace.VMEM)

    flops = (
        2 * 2 * T * Bp * D * 4 * H      # two input projections
        + 2 * 2 * T * Bp * H * 4 * H    # two LSTM recurrences (h @ W_hh)
        + 2 * Bp * H * H                # feature projection
        + 2 * Bp * H * OCp              # head
    )
    transcendentals = 2 * T * Bp * 5 * H + 2 * Bp * H
    bytes_accessed = 4 * (
        T * Bp * D
        + 2 * (D * 4 * H + 4 * H + H * 4 * H)   # per-learner weights/biases
        + H * H + H                              # feature projection
        + H * OCp + OCp                          # head
        + Bp * OCp                               # output
        + 2 * T * Bp * 4 * H                     # xw scratch write+read
    )

    out = pl.pallas_call(
        kernel,
        out_shape=jax.ShapeDtypeStruct((Bp, OCp), jnp.float32),
        in_specs=[vmem] * 11,
        out_specs=vmem,
        scratch_shapes=[
            pltpu.VMEM((T * Bp, 4 * H), jnp.float32),
            pltpu.VMEM((T * Bp, 4 * H), jnp.float32),
        ],
        cost_estimate=pl.CostEstimate(
            flops=flops,
            transcendentals=transcendentals,
            bytes_accessed=bytes_accessed,
        ),
    )(
        x_2d,
        packed["s_wih"], packed["s_b"], packed["s_whh"],
        packed["feat_w"], packed["feat_b"],
        packed["f_wih"], packed["f_b"], packed["f_whh"],
        packed["head_w"], packed["head_b"],
    )
    return out[:B, :OC].reshape(B, out_dim, n_class)


# ----------------------------------------------------------------------------
# Pure-JAX reference (uses the ORIGINAL, unscaled params)
# ----------------------------------------------------------------------------
def _ref_lstm(x_tm, w_ih, w_hh, b, h_mod=None):
    T, B, _ = x_tm.shape
    H = w_hh.shape[0]
    h = jnp.zeros((B, H), jnp.float32)
    c = jnp.zeros((B, H), jnp.float32)
    for t in range(T):
        g = x_tm[t] @ w_ih + h @ w_hh + b
        i = jax.nn.sigmoid(g[:, :H])
        f = jax.nn.sigmoid(g[:, H:2 * H])
        gg = jnp.tanh(g[:, 2 * H:3 * H])
        o = jax.nn.sigmoid(g[:, 3 * H:])
        c = f * c + i * gg
        h = o * jnp.tanh(c)
        if h_mod is not None:
            h = h * h_mod
    return h


def dualnet_market_reference(stock, params, out_dim, n_class):
    x_tm = jnp.transpose(stock, (1, 0, 2))
    h_slow = _ref_lstm(x_tm, params["s_wih"], params["s_whh"], params["s_b"])
    feat = jnp.tanh(h_slow @ params["feat_w"] + params["feat_b"])
    h_fast = _ref_lstm(
        x_tm, params["f_wih"], params["f_whh"], params["f_b"],
        h_mod=jax.nn.sigmoid(feat),
    )
    out = h_fast @ params["head_w"] + params["head_b"]
    return out.reshape(stock.shape[0], out_dim, n_class)


# ----------------------------------------------------------------------------
# Deterministic parameter init
# ----------------------------------------------------------------------------
def init_params(key, input_dim, hidden, out_dim, n_class):
    ks = jax.random.split(key, 11)
    s = 1.0 / jnp.sqrt(hidden)
    u = lambda k, shape: jax.random.uniform(k, shape, jnp.float32, -s, s)
    return {
        "s_wih": u(ks[0], (input_dim, 4 * hidden)),
        "s_whh": u(ks[1], (hidden, 4 * hidden)),
        "s_b":   u(ks[2], (1, 4 * hidden)),
        "feat_w": u(ks[3], (hidden, hidden)),
        "feat_b": u(ks[4], (1, hidden)),
        "f_wih": u(ks[5], (input_dim, 4 * hidden)),
        "f_whh": u(ks[6], (hidden, 4 * hidden)),
        "f_b":   u(ks[7], (1, 4 * hidden)),
        "head_w": u(ks[8], (hidden, out_dim * n_class)),
        "head_b": u(ks[9], (1, out_dim * n_class)),
    }


if __name__ == "__main__":
    # small shapes consistent with DualNetMarket args:
    # batch_size=2, seq_len=8, input_dim=4, hidden=32, out_dim=4, n_class=3
    B, T, D, H, OUT_DIM, N_CLASS = 2, 8, 4, 32, 4, 3

    key = jax.random.PRNGKey(0)
    k_x, k_p = jax.random.split(key)
    stock = jax.random.normal(k_x, (B, T, D), jnp.float32)
    params = init_params(k_p, D, H, OUT_DIM, N_CLASS)

    # One-time parameter packing (hoisted out of the per-call path).
    packed = jax.tree_util.tree_map(jax.block_until_ready, pack_params(params))

    out = dualnet_market_forward(stock, packed, out_dim=OUT_DIM, n_class=N_CLASS)
    out = jax.block_until_ready(out)

    ref = jax.block_until_ready(dualnet_market_reference(stock, params, OUT_DIM, N_CLASS))
    assert out.shape == (B, OUT_DIM, N_CLASS)
    np.testing.assert_allclose(np.asarray(out), np.asarray(ref), rtol=1e-4, atol=1e-4)

    print("KERNEL_OK")
</pallas_src>

<mosaic_0001>
module attributes {stable_mosaic.version = 11 : i64} {
  func.func @dualnet_kernel(%arg0: memref<64x4xf32, #tpu.memory_space<vmem>>, %arg1: memref<4x128xf32, #tpu.memory_space<vmem>>, %arg2: memref<1x128xf32, #tpu.memory_space<vmem>>, %arg3: memref<32x128xf32, #tpu.memory_space<vmem>>, %arg4: memref<32x32xf32, #tpu.memory_space<vmem>>, %arg5: memref<1x32xf32, #tpu.memory_space<vmem>>, %arg6: memref<4x128xf32, #tpu.memory_space<vmem>>, %arg7: memref<1x128xf32, #tpu.memory_space<vmem>>, %arg8: memref<32x128xf32, #tpu.memory_space<vmem>>, %arg9: memref<32x128xf32, #tpu.memory_space<vmem>>, %arg10: memref<1x128xf32, #tpu.memory_space<vmem>>, %arg11: memref<8x128xf32, #tpu.memory_space<vmem>>, %arg12: memref<64x128xf32, #tpu.memory_space<vmem>>, %arg13: memref<64x128xf32, #tpu.memory_space<vmem>>) attributes {dimension_semantics = [], scalar_prefetch = 0 : i64, scratch_operands = 2 : i64, tpu.core_type = #tpu.core_type<tc>} {
    %c0 = arith.constant 0 : index
    %c0_0 = arith.constant 0 : index
    %0 = vector.load %arg0[%c0, %c0_0] : memref<64x4xf32, #tpu.memory_space<vmem>>, vector<64x4xf32>
    %c0_1 = arith.constant 0 : index
    %c0_2 = arith.constant 0 : index
    %1 = vector.load %arg1[%c0_1, %c0_2] : memref<4x128xf32, #tpu.memory_space<vmem>>, vector<4x128xf32>
    %cst = arith.constant dense<0.000000e+00> : vector<64x128xf32>
    %2 = tpu.matmul %0, %1, %cst {dimension_numbers = #tpu.dot_dimension_numbers<[1], [0], [0], [1], [0, 0, 1, 1], [], []>} : vector<64x4xf32>, vector<4x128xf32>, vector<64x128xf32> -> vector<64x128xf32>
    %c0_3 = arith.constant 0 : index
    %c0_4 = arith.constant 0 : index
    %3 = vector.load %arg2[%c0_3, %c0_4] : memref<1x128xf32, #tpu.memory_space<vmem>>, vector<1x128xf32>
    %4 = vector.broadcast %3 : vector<1x128xf32> to vector<64x128xf32>
    %5 = arith.addf %2, %4 : vector<64x128xf32>
    %c0_5 = arith.constant 0 : index
    %c0_6 = arith.constant 0 : index
    %6 = vector.load %arg12[%c0_5, %c0_6] : memref<64x128xf32, #tpu.memory_space<vmem>>, vector<64x128xf32>
    tpu.vector_store %arg12[%c0_5, %c0_6], %5 {strides = array<i32>} : memref<64x128xf32, #tpu.memory_space<vmem>>, vector<64x128xf32>,
    %c0_7 = arith.constant 0 : index
    %c0_8 = arith.constant 0 : index
    %7 = vector.load %arg6[%c0_7, %c0_8] : memref<4x128xf32, #tpu.memory_space<vmem>>, vector<4x128xf32>
    %cst_9 = arith.constant dense<0.000000e+00> : vector<64x128xf32>
    %8 = tpu.matmul %0, %7, %cst_9 {dimension_numbers = #tpu.dot_dimension_numbers<[1], [0], [0], [1], [0, 0, 1, 1], [], []>} : vector<64x4xf32>, vector<4x128xf32>, vector<64x128xf32> -> vector<64x128xf32>
    %c0_10 = arith.constant 0 : index
    %c0_11 = arith.constant 0 : index
    %9 = vector.load %arg7[%c0_10, %c0_11] : memref<1x128xf32, #tpu.memory_space<vmem>>, vector<1x128xf32>
    %10 = vector.broadcast %9 : vector<1x128xf32> to vector<64x128xf32>
    %11 = arith.addf %8, %10 : vector<64x128xf32>
    %c0_12 = arith.constant 0 : index
    %c0_13 = arith.constant 0 : index
    %12 = vector.load %arg13[%c0_12, %c0_13] : memref<64x128xf32, #tpu.memory_space<vmem>>, vector<64x128xf32>
    tpu.vector_store %arg13[%c0_12, %c0_13], %11 {strides = array<i32>} : memref<64x128xf32, #tpu.memory_space<vmem>>, vector<64x128xf32>,
    %c0_14 = arith.constant 0 : index
    %c0_15 = arith.constant 0 : index
    %13 = vector.load %arg3[%c0_14, %c0_15] : memref<32x128xf32, #tpu.memory_space<vmem>>, vector<32x128xf32>
    %cst_16 = arith.constant 0.000000e+00 : f32
    %14 = vector.broadcast %cst_16 : f32 to vector<8x32xf32>
    %cst_17 = arith.constant 0.000000e+00 : f32
    %15 = vector.broadcast %cst_17 : f32 to vector<8x32xf32>
    %c0_18 = arith.constant 0 : index
    %c0_19 = arith.constant 0 : index
    %16 = vector.load %arg12[%c0_18, %c0_19] : memref<64x128xf32, #tpu.memory_space<vmem>>, vector<8x128xf32>
    %cst_20 = arith.constant dense<0.000000e+00> : vector<8x128xf32>
    %17 = tpu.matmul %14, %13, %cst_20 {dimension_numbers = #tpu.dot_dimension_numbers<[1], [0], [0], [1], [0, 0, 1, 1], [], []>} : vector<8x32xf32>, vector<32x128xf32>, vector<8x128xf32> -> vector<8x128xf32>
    %18 = arith.addf %16, %17 : vector<8x128xf32>
    %19 = arith.negf %18 : vector<8x128xf32>
    %20 = math.exp %19 : vector<8x128xf32>
    %cst_21 = arith.constant 1.000000e+00 : f32
    %21 = vector.broadcast %cst_21 : f32 to vector<8x128xf32>
    %22 = arith.addf %21, %20 : vector<8x128xf32>
    %23 = arith.divf %21, %22 : vector<8x128xf32>
    %24 = vector.extract_strided_slice %23 {offsets = [0, 0], sizes = [8, 32], strides = [1, 1]} : vector<8x128xf32> to vector<8x32xf32>
    %25 = vector.extract_strided_slice %23 {offsets = [0, 32], sizes = [8, 32], strides = [1, 1]} : vector<8x128xf32> to vector<8x32xf32>
    %26 = vector.extract_strided_slice %23 {offsets = [0, 64], sizes = [8, 32], strides = [1, 1]} : vector<8x128xf32> to vector<8x32xf32>
    %cst_22 = arith.constant 2.000000e+00 : f32
    %27 = vector.broadcast %cst_22 : f32 to vector<8x32xf32>
    %28 = arith.mulf %27, %26 : vector<8x32xf32>
    %cst_23 = arith.constant 1.000000e+00 : f32
    %29 = vector.broadcast %cst_23 : f32 to vector<8x32xf32>
    %30 = arith.subf %28, %29 : vector<8x32xf32>
    %31 = vector.extract_strided_slice %23 {offsets = [0, 96], sizes = [8, 32], strides = [1, 1]} : vector<8x128xf32> to vector<8x32xf32>
    %32 = arith.mulf %25, %15 : vector<8x32xf32>
    %33 = arith.mulf %24, %30 : vector<8x32xf32>
    %34 = arith.addf %32, %33 : vector<8x32xf32>
    %35 = math.tanh %34 : vector<8x32xf32>
    %36 = arith.mulf %31, %35 : vector<8x32xf32>
    %c8 = arith.constant 8 : index
    %c0_24 = arith.constant 0 : index
    %37 = vector.load %arg12[%c8, %c0_24] : memref<64x128xf32, #tpu.memory_space<vmem>>, vector<8x128xf32>
    %cst_25 = arith.constant dense<0.000000e+00> : vector<8x128xf32>
    %38 = tpu.matmul %36, %13, %cst_25 {dimension_numbers = #tpu.dot_dimension_numbers<[1], [0], [0], [1], [0, 0, 1, 1], [], []>} : vector<8x32xf32>, vector<32x128xf32>, vector<8x128xf32> -> vector<8x128xf32>
    %39 = arith.addf %37, %38 : vector<8x128xf32>
    %40 = arith.negf %39 : vector<8x128xf32>
    %41 = math.exp %40 : vector<8x128xf32>
    %cst_26 = arith.constant 1.000000e+00 : f32
    %42 = vector.broadcast %cst_26 : f32 to vector<8x128xf32>
    %43 = arith.addf %42, %41 : vector<8x128xf32>
    %44 = arith.divf %42, %43 : vector<8x128xf32>
    %45 = vector.extract_strided_slice %44 {offsets = [0, 0], sizes = [8, 32], strides = [1, 1]} : vector<8x128xf32> to vector<8x32xf32>
    %46 = vector.extract_strided_slice %44 {offsets = [0, 32], sizes = [8, 32], strides = [1, 1]} : vector<8x128xf32> to vector<8x32xf32>
    %47 = vector.extract_strided_slice %44 {offsets = [0, 64], sizes = [8, 32], strides = [1, 1]} : vector<8x128xf32> to vector<8x32xf32>
    %cst_27 = arith.constant 2.000000e+00 : f32
    %48 = vector.broadcast %cst_27 : f32 to vector<8x32xf32>
    %49 = arith.mulf %48, %47 : vector<8x32xf32>
    %cst_28 = arith.constant 1.000000e+00 : f32
    %50 = vector.broadcast %cst_28 : f32 to vector<8x32xf32>
    %51 = arith.subf %49, %50 : vector<8x32xf32>
    %52 = vector.extract_strided_slice %44 {offsets = [0, 96], sizes = [8, 32], strides = [1, 1]} : vector<8x128xf32> to vector<8x32xf32>
    %53 = arith.mulf %46, %34 : vector<8x32xf32>
    %54 = arith.mulf %45, %51 : vector<8x32xf32>
    %55 = arith.addf %53, %54 : vector<8x32xf32>
    %56 = math.tanh %55 : vector<8x32xf32>
    %57 = arith.mulf %52, %56 : vector<8x32xf32>
    %c16 = arith.constant 16 : index
    %c0_29 = arith.constant 0 : index
    %58 = vector.load %arg12[%c16, %c0_29] : memref<64x128xf32, #tpu.memory_space<vmem>>, vector<8x128xf32>
    %cst_30 = arith.constant dense<0.000000e+00> : vector<8x128xf32>
    %59 = tpu.matmul %57, %13, %cst_30 {dimension_numbers = #tpu.dot_dimension_numbers<[1], [0], [0], [1], [0, 0, 1, 1], [], []>} : vector<8x32xf32>, vector<32x128xf32>, vector<8x128xf32> -> vector<8x128xf32>
    %60 = arith.addf %58, %59 : vector<8x128xf32>
    %61 = arith.negf %60 : vector<8x128xf32>
    %62 = math.exp %61 : vector<8x128xf32>
    %cst_31 = arith.constant 1.000000e+00 : f32
    %63 = vector.broadcast %cst_31 : f32 to vector<8x128xf32>
    %64 = arith.addf %63, %62 : vector<8x128xf32>
    %65 = arith.divf %63, %64 : vector<8x128xf32>
    %66 = vector.extract_strided_slice %65 {offsets = [0, 0], sizes = [8, 32], strides = [1, 1]} : vector<8x128xf32> to vector<8x32xf32>
    %67 = vector.extract_strided_slice %65 {offsets = [0, 32], sizes = [8, 32], strides = [1, 1]} : vector<8x128xf32> to vector<8x32xf32>
    %68 = vector.extract_strided_slice %65 {offsets = [0, 64], sizes = [8, 32], strides = [1, 1]} : vector<8x128xf32> to vector<8x32xf32>
    %cst_32 = arith.constant 2.000000e+00 : f32
    %69 = vector.broadcast %cst_32 : f32 to vector<8x32xf32>
    %70 = arith.mulf %69, %68 : vector<8x32xf32>
    %cst_33 = arith.constant 1.000000e+00 : f32
    %71 = vector.broadcast %cst_33 : f32 to vector<8x32xf32>
    %72 = arith.subf %70, %71 : vector<8x32xf32>
    %73 = vector.extract_strided_slice %65 {offsets = [0, 96], sizes = [8, 32], strides = [1, 1]} : vector<8x128xf32> to vector<8x32xf32>
    %74 = arith.mulf %67, %55 : vector<8x32xf32>
    %75 = arith.mulf %66, %72 : vector<8x32xf32>
    %76 = arith.addf %74, %75 : vector<8x32xf32>
    %77 = math.tanh %76 : vector<8x32xf32>
    %78 = arith.mulf %73, %77 : vector<8x32xf32>
    %c24 = arith.constant 24 : index
    %c0_34 = arith.constant 0 : index
    %79 = vector.load %arg12[%c24, %c0_34] : memref<64x128xf32, #tpu.memory_space<vmem>>, vector<8x128xf32>
    %cst_35 = arith.constant dense<0.000000e+00> : vector<8x128xf32>
    %80 = tpu.matmul %78, %13, %cst_35 {dimension_numbers = #tpu.dot_dimension_numbers<[1], [0], [0], [1], [0, 0, 1, 1], [], []>} : vector<8x32xf32>, vector<32x128xf32>, vector<8x128xf32> -> vector<8x128xf32>
    %81 = arith.addf %79, %80 : vector<8x128xf32>
    %82 = arith.negf %81 : vector<8x128xf32>
    %83 = math.exp %82 : vector<8x128xf32>
    %cst_36 = arith.constant 1.000000e+00 : f32
    %84 = vector.broadcast %cst_36 : f32 to vector<8x128xf32>
    %85 = arith.addf %84, %83 : vector<8x128xf32>
    %86 = arith.divf %84, %85 : vector<8x128xf32>
    %87 = vector.extract_strided_slice %86 {offsets = [0, 0], sizes = [8, 32], strides = [1, 1]} : vector<8x128xf32> to vector<8x32xf32>
    %88 = vector.extract_strided_slice %86 {offsets = [0, 32], sizes = [8, 32], strides = [1, 1]} : vector<8x128xf32> to vector<8x32xf32>
    %89 = vector.extract_strided_slice %86 {offsets = [0, 64], sizes = [8, 32], strides = [1, 1]} : vector<8x128xf32> to vector<8x32xf32>
    %cst_37 = arith.constant 2.000000e+00 : f32
    %90 = vector.broadcast %cst_37 : f32 to vector<8x32xf32>
    %91 = arith.mulf %90, %89 : vector<8x32xf32>
    %cst_38 = arith.constant 1.000000e+00 : f32
    %92 = vector.broadcast %cst_38 : f32 to vector<8x32xf32>
    %93 = arith.subf %91, %92 : vector<8x32xf32>
    %94 = vector.extract_strided_slice %86 {offsets = [0, 96], sizes = [8, 32], strides = [1, 1]} : vector<8x128xf32> to vector<8x32xf32>
    %95 = arith.mulf %88, %76 : vector<8x32xf32>
    %96 = arith.mulf %87, %93 : vector<8x32xf32>
    %97 = arith.addf %95, %96 : vector<8x32xf32>
    %98 = math.tanh %97 : vector<8x32xf32>
    %99 = arith.mulf %94, %98 : vector<8x32xf32>
    %c32 = arith.constant 32 : index
    %c0_39 = arith.constant 0 : index
    %100 = vector.load %arg12[%c32, %c0_39] : memref<64x128xf32, #tpu.memory_space<vmem>>, vector<8x128xf32>
    %cst_40 = arith.constant dense<0.000000e+00> : vector<8x128xf32>
    %101 = tpu.matmul %99, %13, %cst_40 {dimension_numbers = #tpu.dot_dimension_numbers<[1], [0], [0], [1], [0, 0, 1, 1], [], []>} : vector<8x32xf32>, vector<32x128xf32>, vector<8x128xf32> -> vector<8x128xf32>
    %102 = arith.addf %100, %101 : vector<8x128xf32>
    %103 = arith.negf %102 : vector<8x128xf32>
    %104 = math.exp %103 : vector<8x128xf32>
    %cst_41 = arith.constant 1.000000e+00 : f32
    %105 = vector.broadcast %cst_41 : f32 to vector<8x128xf32>
    %106 = arith.addf %105, %104 : vector<8x128xf32>
    %107 = arith.divf %105, %106 : vector<8x128xf32>
    %108 = vector.extract_strided_slice %107 {offsets = [0, 0], sizes = [8, 32], strides = [1, 1]} : vector<8x128xf32> to vector<8x32xf32>
    %109 = vector.extract_strided_slice %107 {offsets = [0, 32], sizes = [8, 32], strides = [1, 1]} : vector<8x128xf32> to vector<8x32xf32>
    %110 = vector.extract_strided_slice %107 {offsets = [0, 64], sizes = [8, 32], strides = [1, 1]} : vector<8x128xf32> to vector<8x32xf32>
    %cst_42 = arith.constant 2.000000e+00 : f32
    %111 = vector.broadcast %cst_42 : f32 to vector<8x32xf32>
    %112 = arith.mulf %111, %110 : vector<8x32xf32>
    %cst_43 = arith.constant 1.000000e+00 : f32
    %113 = vector.broadcast %cst_43 : f32 to vector<8x32xf32>
    %114 = arith.subf %112, %113 : vector<8x32xf32>
    %115 = vector.extract_strided_slice %107 {offsets = [0, 96], sizes = [8, 32], strides = [1, 1]} : vector<8x128xf32> to vector<8x32xf32>
    %116 = arith.mulf %109, %97 : vector<8x32xf32>
    %117 = arith.mulf %108, %114 : vector<8x32xf32>
    %118 = arith.addf %116, %117 : vector<8x32xf32>
    %119 = math.tanh %118 : vector<8x32xf32>
    %120 = arith.mulf %115, %119 : vector<8x32xf32>
    %c40 = arith.constant 40 : index
    %c0_44 = arith.constant 0 : index
    %121 = vector.load %arg12[%c40, %c0_44] : memref<64x128xf32, #tpu.memory_space<vmem>>, vector<8x128xf32>
    %cst_45 = arith.constant dense<0.000000e+00> : vector<8x128xf32>
    %122 = tpu.matmul %120, %13, %cst_45 {dimension_numbers = #tpu.dot_dimension_numbers<[1], [0], [0], [1], [0, 0, 1, 1], [], []>} : vector<8x32xf32>, vector<32x128xf32>, vector<8x128xf32> -> vector<8x128xf32>
    %123 = arith.addf %121, %122 : vector<8x128xf32>
    %124 = arith.negf %123 : vector<8x128xf32>
    %125 = math.exp %124 : vector<8x128xf32>
    %cst_46 = arith.constant 1.000000e+00 : f32
    %126 = vector.broadcast %cst_46 : f32 to vector<8x128xf32>
    %127 = arith.addf %126, %125 : vector<8x128xf32>
    %128 = arith.divf %126, %127 : vector<8x128xf32>
    %129 = vector.extract_strided_slice %128 {offsets = [0, 0], sizes = [8, 32], strides = [1, 1]} : vector<8x128xf32> to vector<8x32xf32>
    %130 = vector.extract_strided_slice %128 {offsets = [0, 32], sizes = [8, 32], strides = [1, 1]} : vector<8x128xf32> to vector<8x32xf32>
    %131 = vector.extract_strided_slice %128 {offsets = [0, 64], sizes = [8, 32], strides = [1, 1]} : vector<8x128xf32> to vector<8x32xf32>
    %cst_47 = arith.constant 2.000000e+00 : f32
    %132 = vector.broadcast %cst_47 : f32 to vector<8x32xf32>
    %133 = arith.mulf %132, %131 : vector<8x32xf32>
    %cst_48 = arith.constant 1.000000e+00 : f32
    %134 = vector.broadcast %cst_48 : f32 to vector<8x32xf32>
    %135 = arith.subf %133, %134 : vector<8x32xf32>
    %136 = vector.extract_strided_slice %128 {offsets = [0, 96], sizes = [8, 32], strides = [1, 1]} : vector<8x128xf32> to vector<8x32xf32>
    %137 = arith.mulf %130, %118 : vector<8x32xf32>
    %138 = arith.mulf %129, %135 : vector<8x32xf32>
    %139 = arith.addf %137, %138 : vector<8x32xf32>
    %140 = math.tanh %139 : vector<8x32xf32>
    %141 = arith.mulf %136, %140 : vector<8x32xf32>
    %c48 = arith.constant 48 : index
    %c0_49 = arith.constant 0 : index
    %142 = vector.load %arg12[%c48, %c0_49] : memref<64x128xf32, #tpu.memory_space<vmem>>, vector<8x128xf32>
    %cst_50 = arith.constant dense<0.000000e+00> : vector<8x128xf32>
    %143 = tpu.matmul %141, %13, %cst_50 {dimension_numbers = #tpu.dot_dimension_numbers<[1], [0], [0], [1], [0, 0, 1, 1], [], []>} : vector<8x32xf32>, vector<32x128xf32>, vector<8x128xf32> -> vector<8x128xf32>
    %144 = arith.addf %142, %143 : vector<8x128xf32>
    %145 = arith.negf %144 : vector<8x128xf32>
    %146 = math.exp %145 : vector<8x128xf32>
    %cst_51 = arith.constant 1.000000e+00 : f32
    %147 = vector.broadcast %cst_51 : f32 to vector<8x128xf32>
    %148 = arith.addf %147, %146 : vector<8x128xf32>
    %149 = arith.divf %147, %148 : vector<8x128xf32>
    %150 = vector.extract_strided_slice %149 {offsets = [0, 0], sizes = [8, 32], strides = [1, 1]} : vector<8x128xf32> to vector<8x32xf32>
    %151 = vector.extract_strided_slice %149 {offsets = [0, 32], sizes = [8, 32], strides = [1, 1]} : vector<8x128xf32> to vector<8x32xf32>
    %152 = vector.extract_strided_slice %149 {offsets = [0, 64], sizes = [8, 32], strides = [1, 1]} : vector<8x128xf32> to vector<8x32xf32>
    %cst_52 = arith.constant 2.000000e+00 : f32
    %153 = vector.broadcast %cst_52 : f32 to vector<8x32xf32>
    %154 = arith.mulf %153, %152 : vector<8x32xf32>
    %cst_53 = arith.constant 1.000000e+00 : f32
    %155 = vector.broadcast %cst_53 : f32 to vector<8x32xf32>
    %156 = arith.subf %154, %155 : vector<8x32xf32>
    %157 = vector.extract_strided_slice %149 {offsets = [0, 96], sizes = [8, 32], strides = [1, 1]} : vector<8x128xf32> to vector<8x32xf32>
    %158 = arith.mulf %151, %139 : vector<8x32xf32>
    %159 = arith.mulf %150, %156 : vector<8x32xf32>
    %160 = arith.addf %158, %159 : vector<8x32xf32>
    %161 = math.tanh %160 : vector<8x32xf32>
    %162 = arith.mulf %157, %161 : vector<8x32xf32>
    %c56 = arith.constant 56 : index
    %c0_54 = arith.constant 0 : index
    %163 = vector.load %arg12[%c56, %c0_54] : memref<64x128xf32, #tpu.memory_space<vmem>>, vector<8x128xf32>
    %cst_55 = arith.constant dense<0.000000e+00> : vector<8x128xf32>
    %164 = tpu.matmul %162, %13, %cst_55 {dimension_numbers = #tpu.dot_dimension_numbers<[1], [0], [0], [1], [0, 0, 1, 1], [], []>} : vector<8x32xf32>, vector<32x128xf32>, vector<8x128xf32> -> vector<8x128xf32>
    %165 = arith.addf %163, %164 : vector<8x128xf32>
    %166 = arith.negf %165 : vector<8x128xf32>
    %167 = math.exp %166 : vector<8x128xf32>
    %cst_56 = arith.constant 1.000000e+00 : f32
    %168 = vector.broadcast %cst_56 : f32 to vector<8x128xf32>
    %169 = arith.addf %168, %167 : vector<8x128xf32>
    %170 = arith.divf %168, %169 : vector<8x128xf32>
    %171 = vector.extract_strided_slice %170 {offsets = [0, 0], sizes = [8, 32], strides = [1, 1]} : vector<8x128xf32> to vector<8x32xf32>
    %172 = vector.extract_strided_slice %170 {offsets = [0, 32], sizes = [8, 32], strides = [1, 1]} : vector<8x128xf32> to vector<8x32xf32>
    %173 = vector.extract_strided_slice %170 {offsets = [0, 64], sizes = [8, 32], strides = [1, 1]} : vector<8x128xf32> to vector<8x32xf32>
    %cst_57 = arith.constant 2.000000e+00 : f32
    %174 = vector.broadcast %cst_57 : f32 to vector<8x32xf32>
    %175 = arith.mulf %174, %173 : vector<8x32xf32>
    %cst_58 = arith.constant 1.000000e+00 : f32
    %176 = vector.broadcast %cst_58 : f32 to vector<8x32xf32>
    %177 = arith.subf %175, %176 : vector<8x32xf32>
    %178 = vector.extract_strided_slice %170 {offsets = [0, 96], sizes = [8, 32], strides = [1, 1]} : vector<8x128xf32> to vector<8x32xf32>
    %179 = arith.mulf %172, %160 : vector<8x32xf32>
    %180 = arith.mulf %171, %177 : vector<8x32xf32>
    %181 = arith.addf %179, %180 : vector<8x32xf32>
    %182 = math.tanh %181 : vector<8x32xf32>
    %183 = arith.mulf %178, %182 : vector<8x32xf32>
    %c0_59 = arith.constant 0 : index
    %c0_60 = arith.constant 0 : index
    %184 = vector.load %arg4[%c0_59, %c0_60] : memref<32x32xf32, #tpu.memory_space<vmem>>, vector<32x32xf32>
    %cst_61 = arith.constant dense<0.000000e+00> : vector<8x32xf32>
    %185 = tpu.matmul %183, %184, %cst_61 {dimension_numbers = #tpu.dot_dimension_numbers<[1], [0], [0], [1], [0, 0, 1, 1], [], []>} : vector<8x32xf32>, vector<32x32xf32>, vector<8x32xf32> -> vector<8x32xf32>
    %c0_62 = arith.constant 0 : index
    %c0_63 = arith.constant 0 : index
    %186 = vector.load %arg5[%c0_62, %c0_63] : memref<1x32xf32, #tpu.memory_space<vmem>>, vector<1x32xf32>
    %187 = vector.broadcast %186 : vector<1x32xf32> to vector<8x32xf32>
    %188 = arith.addf %185, %187 : vector<8x32xf32>
    %189 = math.tanh %188 : vector<8x32xf32>
    %190 = arith.negf %189 : vector<8x32xf32>
    %191 = math.exp %190 : vector<8x32xf32>
    %cst_64 = arith.constant 1.000000e+00 : f32
    %192 = vector.broadcast %cst_64 : f32 to vector<8x32xf32>
    %193 = arith.addf %192, %191 : vector<8x32xf32>
    %194 = arith.divf %192, %193 : vector<8x32xf32>
    %c0_65 = arith.constant 0 : index
    %c0_66 = arith.constant 0 : index
    %195 = vector.load %arg8[%c0_65, %c0_66] : memref<32x128xf32, #tpu.memory_space<vmem>>, vector<32x128xf32>
    %cst_67 = arith.constant 0.000000e+00 : f32
    %196 = vector.broadcast %cst_67 : f32 to vector<8x32xf32>
    %cst_68 = arith.constant 0.000000e+00 : f32
    %197 = vector.broadcast %cst_68 : f32 to vector<8x32xf32>
    %c0_69 = arith.constant 0 : index
    %c0_70 = arith.constant 0 : index
    %198 = vector.load %arg13[%c0_69, %c0_70] : memref<64x128xf32, #tpu.memory_space<vmem>>, vector<8x128xf32>
    %cst_71 = arith.constant dense<0.000000e+00> : vector<8x128xf32>
    %199 = tpu.matmul %196, %195, %cst_71 {dimension_numbers = #tpu.dot_dimension_numbers<[1], [0], [0], [1], [0, 0, 1, 1], [], []>} : vector<8x32xf32>, vector<32x128xf32>, vector<8x128xf32> -> vector<8x128xf32>
    %200 = arith.addf %198, %199 : vector<8x128xf32>
    %201 = arith.negf %200 : vector<8x128xf32>
    %202 = math.exp %201 : vector<8x128xf32>
    %cst_72 = arith.constant 1.000000e+00 : f32
    %203 = vector.broadcast %cst_72 : f32 to vector<8x128xf32>
    %204 = arith.addf %203, %202 : vector<8x128xf32>
    %205 = arith.divf %203, %204 : vector<8x128xf32>
    %206 = vector.extract_strided_slice %205 {offsets = [0, 0], sizes = [8, 32], strides = [1, 1]} : vector<8x128xf32> to vector<8x32xf32>
    %207 = vector.extract_strided_slice %205 {offsets = [0, 32], sizes = [8, 32], strides = [1, 1]} : vector<8x128xf32> to vector<8x32xf32>
    %208 = vector.extract_strided_slice %205 {offsets = [0, 64], sizes = [8, 32], strides = [1, 1]} : vector<8x128xf32> to vector<8x32xf32>
    %cst_73 = arith.constant 2.000000e+00 : f32
    %209 = vector.broadcast %cst_73 : f32 to vector<8x32xf32>
    %210 = arith.mulf %209, %208 : vector<8x32xf32>
    %cst_74 = arith.constant 1.000000e+00 : f32
    %211 = vector.broadcast %cst_74 : f32 to vector<8x32xf32>
    %212 = arith.subf %210, %211 : vector<8x32xf32>
    %213 = vector.extract_strided_slice %205 {offsets = [0, 96], sizes = [8, 32], strides = [1, 1]} : vector<8x128xf32> to vector<8x32xf32>
    %214 = arith.mulf %207, %197 : vector<8x32xf32>
    %215 = arith.mulf %206, %212 : vector<8x32xf32>
    %216 = arith.addf %214, %215 : vector<8x32xf32>
    %217 = math.tanh %216 : vector<8x32xf32>
    %218 = arith.mulf %213, %217 : vector<8x32xf32>
    %219 = arith.mulf %218, %194 : vector<8x32xf32>
    %c8_75 = arith.constant 8 : index
    %c0_76 = arith.constant 0 : index
    %220 = vector.load %arg13[%c8_75, %c0_76] : memref<64x128xf32, #tpu.memory_space<vmem>>, vector<8x128xf32>
    %cst_77 = arith.constant dense<0.000000e+00> : vector<8x128xf32>
    %221 = tpu.matmul %219, %195, %cst_77 {dimension_numbers = #tpu.dot_dimension_numbers<[1], [0], [0], [1], [0, 0, 1, 1], [], []>} : vector<8x32xf32>, vector<32x128xf32>, vector<8x128xf32> -> vector<8x128xf32>
    %222 = arith.addf %220, %221 : vector<8x128xf32>
    %223 = arith.negf %222 : vector<8x128xf32>
    %224 = math.exp %223 : vector<8x128xf32>
    %cst_78 = arith.constant 1.000000e+00 : f32
    %225 = vector.broadcast %cst_78 : f32 to vector<8x128xf32>
    %226 = arith.addf %225, %224 : vector<8x128xf32>
    %227 = arith.divf %225, %226 : vector<8x128xf32>
    %228 = vector.extract_strided_slice %227 {offsets = [0, 0], sizes = [8, 32], strides = [1, 1]} : vector<8x128xf32> to vector<8x32xf32>
    %229 = vector.extract_strided_slice %227 {offsets = [0, 32], sizes = [8, 32], strides = [1, 1]} : vector<8x128xf32> to vector<8x32xf32>
    %230 = vector.extract_strided_slice %227 {offsets = [0, 64], sizes = [8, 32], strides = [1, 1]} : vector<8x128xf32> to vector<8x32xf32>
    %cst_79 = arith.constant 2.000000e+00 : f32
    %231 = vector.broadcast %cst_79 : f32 to vector<8x32xf32>
    %232 = arith.mulf %231, %230 : vector<8x32xf32>
    %cst_80 = arith.constant 1.000000e+00 : f32
    %233 = vector.broadcast %cst_80 : f32 to vector<8x32xf32>
    %234 = arith.subf %232, %233 : vector<8x32xf32>
    %235 = vector.extract_strided_slice %227 {offsets = [0, 96], sizes = [8, 32], strides = [1, 1]} : vector<8x128xf32> to vector<8x32xf32>
    %236 = arith.mulf %229, %216 : vector<8x32xf32>
    %237 = arith.mulf %228, %234 : vector<8x32xf32>
    %238 = arith.addf %236, %237 : vector<8x32xf32>
    %239 = math.tanh %238 : vector<8x32xf32>
    %240 = arith.mulf %235, %239 : vector<8x32xf32>
    %241 = arith.mulf %240, %194 : vector<8x32xf32>
    %c16_81 = arith.constant 16 : index
    %c0_82 = arith.constant 0 : index
    %242 = vector.load %arg13[%c16_81, %c0_82] : memref<64x128xf32, #tpu.memory_space<vmem>>, vector<8x128xf32>
    %cst_83 = arith.constant dense<0.000000e+00> : vector<8x128xf32>
    %243 = tpu.matmul %241, %195, %cst_83 {dimension_numbers = #tpu.dot_dimension_numbers<[1], [0], [0], [1], [0, 0, 1, 1], [], []>} : vector<8x32xf32>, vector<32x128xf32>, vector<8x128xf32> -> vector<8x128xf32>
    %244 = arith.addf %242, %243 : vector<8x128xf32>
    %245 = arith.negf %244 : vector<8x128xf32>
    %246 = math.exp %245 : vector<8x128xf32>
    %cst_84 = arith.constant 1.000000e+00 : f32
    %247 = vector.broadcast %cst_84 : f32 to vector<8x128xf32>
    %248 = arith.addf %247, %246 : vector<8x128xf32>
    %249 = arith.divf %247, %248 : vector<8x128xf32>
    %250 = vector.extract_strided_slice %249 {offsets = [0, 0], sizes = [8, 32], strides = [1, 1]} : vector<8x128xf32> to vector<8x32xf32>
    %251 = vector.extract_strided_slice %249 {offsets = [0, 32], sizes = [8, 32], strides = [1, 1]} : vector<8x128xf32> to vector<8x32xf32>
    %252 = vector.extract_strided_slice %249 {offsets = [0, 64], sizes = [8, 32], strides = [1, 1]} : vector<8x128xf32> to vector<8x32xf32>
    %cst_85 = arith.constant 2.000000e+00 : f32
    %253 = vector.broadcast %cst_85 : f32 to vector<8x32xf32>
    %254 = arith.mulf %253, %252 : vector<8x32xf32>
    %cst_86 = arith.constant 1.000000e+00 : f32
    %255 = vector.broadcast %cst_86 : f32 to vector<8x32xf32>
    %256 = arith.subf %254, %255 : vector<8x32xf32>
    %257 = vector.extract_strided_slice %249 {offsets = [0, 96], sizes = [8, 32], strides = [1, 1]} : vector<8x128xf32> to vector<8x32xf32>
    %258 = arith.mulf %251, %238 : vector<8x32xf32>
    %259 = arith.mulf %250, %256 : vector<8x32xf32>
    %260 = arith.addf %258, %259 : vector<8x32xf32>
    %261 = math.tanh %260 : vector<8x32xf32>
    %262 = arith.mulf %257, %261 : vector<8x32xf32>
    %263 = arith.mulf %262, %194 : vector<8x32xf32>
    %c24_87 = arith.constant 24 : index
    %c0_88 = arith.constant 0 : index
    %264 = vector.load %arg13[%c24_87, %c0_88] : memref<64x128xf32, #tpu.memory_space<vmem>>, vector<8x128xf32>
    %cst_89 = arith.constant dense<0.000000e+00> : vector<8x128xf32>
    %265 = tpu.matmul %263, %195, %cst_89 {dimension_numbers = #tpu.dot_dimension_numbers<[1], [0], [0], [1], [0, 0, 1, 1], [], []>} : vector<8x32xf32>, vector<32x128xf32>, vector<8x128xf32> -> vector<8x128xf32>
    %266 = arith.addf %264, %265 : vector<8x128xf32>
    %267 = arith.negf %266 : vector<8x128xf32>
    %268 = math.exp %267 : vector<8x128xf32>
    %cst_90 = arith.constant 1.000000e+00 : f32
    %269 = vector.broadcast %cst_90 : f32 to vector<8x128xf32>
    %270 = arith.addf %269, %268 : vector<8x128xf32>
    %271 = arith.divf %269, %270 : vector<8x128xf32>
    %272 = vector.extract_strided_slice %271 {offsets = [0, 0], sizes = [8, 32], strides = [1, 1]} : vector<8x128xf32> to vector<8x32xf32>
    %273 = vector.extract_strided_slice %271 {offsets = [0, 32], sizes = [8, 32], strides = [1, 1]} : vector<8x128xf32> to vector<8x32xf32>
    %274 = vector.extract_strided_slice %271 {offsets = [0, 64], sizes = [8, 32], strides = [1, 1]} : vector<8x128xf32> to vector<8x32xf32>
    %cst_91 = arith.constant 2.000000e+00 : f32
    %275 = vector.broadcast %cst_91 : f32 to vector<8x32xf32>
    %276 = arith.mulf %275, %274 : vector<8x32xf32>
    %cst_92 = arith.constant 1.000000e+00 : f32
    %277 = vector.broadcast %cst_92 : f32 to vector<8x32xf32>
    %278 = arith.subf %276, %277 : vector<8x32xf32>
    %279 = vector.extract_strided_slice %271 {offsets = [0, 96], sizes = [8, 32], strides = [1, 1]} : vector<8x128xf32> to vector<8x32xf32>
    %280 = arith.mulf %273, %260 : vector<8x32xf32>
    %281 = arith.mulf %272, %278 : vector<8x32xf32>
    %282 = arith.addf %280, %281 : vector<8x32xf32>
    %283 = math.tanh %282 : vector<8x32xf32>
    %284 = arith.mulf %279, %283 : vector<8x32xf32>
    %285 = arith.mulf %284, %194 : vector<8x32xf32>
    %c32_93 = arith.constant 32 : index
    %c0_94 = arith.constant 0 : index
    %286 = vector.load %arg13[%c32_93, %c0_94] : memref<64x128xf32, #tpu.memory_space<vmem>>, vector<8x128xf32>
    %cst_95 = arith.constant dense<0.000000e+00> : vector<8x128xf32>
    %287 = tpu.matmul %285, %195, %cst_95 {dimension_numbers = #tpu.dot_dimension_numbers<[1], [0], [0], [1], [0, 0, 1, 1], [], []>} : vector<8x32xf32>, vector<32x128xf32>, vector<8x128xf32> -> vector<8x128xf32>
    %288 = arith.addf %286, %287 : vector<8x128xf32>
    %289 = arith.negf %288 : vector<8x128xf32>
    %290 = math.exp %289 : vector<8x128xf32>
    %cst_96 = arith.constant 1.000000e+00 : f32
    %291 = vector.broadcast %cst_96 : f32 to vector<8x128xf32>
    %292 = arith.addf %291, %290 : vector<8x128xf32>
    %293 = arith.divf %291, %292 : vector<8x128xf32>
    %294 = vector.extract_strided_slice %293 {offsets = [0, 0], sizes = [8, 32], strides = [1, 1]} : vector<8x128xf32> to vector<8x32xf32>
    %295 = vector.extract_strided_slice %293 {offsets = [0, 32], sizes = [8, 32], strides = [1, 1]} : vector<8x128xf32> to vector<8x32xf32>
    %296 = vector.extract_strided_slice %293 {offsets = [0, 64], sizes = [8, 32], strides = [1, 1]} : vector<8x128xf32> to vector<8x32xf32>
    %cst_97 = arith.constant 2.000000e+00 : f32
    %297 = vector.broadcast %cst_97 : f32 to vector<8x32xf32>
    %298 = arith.mulf %297, %296 : vector<8x32xf32>
    %cst_98 = arith.constant 1.000000e+00 : f32
    %299 = vector.broadcast %cst_98 : f32 to vector<8x32xf32>
    %300 = arith.subf %298, %299 : vector<8x32xf32>
    %301 = vector.extract_strided_slice %293 {offsets = [0, 96], sizes = [8, 32], strides = [1, 1]} : vector<8x128xf32> to vector<8x32xf32>
    %302 = arith.mulf %295, %282 : vector<8x32xf32>
    %303 = arith.mulf %294, %300 : vector<8x32xf32>
    %304 = arith.addf %302, %303 : vector<8x32xf32>
    %305 = math.tanh %304 : vector<8x32xf32>
    %306 = arith.mulf %301, %305 : vector<8x32xf32>
    %307 = arith.mulf %306, %194 : vector<8x32xf32>
    %c40_99 = arith.constant 40 : index
    %c0_100 = arith.constant 0 : index
    %308 = vector.load %arg13[%c40_99, %c0_100] : memref<64x128xf32, #tpu.memory_space<vmem>>, vector<8x128xf32>
    %cst_101 = arith.constant dense<0.000000e+00> : vector<8x128xf32>
    %309 = tpu.matmul %307, %195, %cst_101 {dimension_numbers = #tpu.dot_dimension_numbers<[1], [0], [0], [1], [0, 0, 1, 1], [], []>} : vector<8x32xf32>, vector<32x128xf32>, vector<8x128xf32> -> vector<8x128xf32>
    %310 = arith.addf %308, %309 : vector<8x128xf32>
    %311 = arith.negf %310 : vector<8x128xf32>
    %312 = math.exp %311 : vector<8x128xf32>
    %cst_102 = arith.constant 1.000000e+00 : f32
    %313 = vector.broadcast %cst_102 : f32 to vector<8x128xf32>
    %314 = arith.addf %313, %312 : vector<8x128xf32>
    %315 = arith.divf %313, %314 : vector<8x128xf32>
    %316 = vector.extract_strided_slice %315 {offsets = [0, 0], sizes = [8, 32], strides = [1, 1]} : vector<8x128xf32> to vector<8x32xf32>
    %317 = vector.extract_strided_slice %315 {offsets = [0, 32], sizes = [8, 32], strides = [1, 1]} : vector<8x128xf32> to vector<8x32xf32>
    %318 = vector.extract_strided_slice %315 {offsets = [0, 64], sizes = [8, 32], strides = [1, 1]} : vector<8x128xf32> to vector<8x32xf32>
    %cst_103 = arith.constant 2.000000e+00 : f32
    %319 = vector.broadcast %cst_103 : f32 to vector<8x32xf32>
    %320 = arith.mulf %319, %318 : vector<8x32xf32>
    %cst_104 = arith.constant 1.000000e+00 : f32
    %321 = vector.broadcast %cst_104 : f32 to vector<8x32xf32>
    %322 = arith.subf %320, %321 : vector<8x32xf32>
    %323 = vector.extract_strided_slice %315 {offsets = [0, 96], sizes = [8, 32], strides = [1, 1]} : vector<8x128xf32> to vector<8x32xf32>
    %324 = arith.mulf %317, %304 : vector<8x32xf32>
    %325 = arith.mulf %316, %322 : vector<8x32xf32>
    %326 = arith.addf %324, %325 : vector<8x32xf32>
    %327 = math.tanh %326 : vector<8x32xf32>
    %328 = arith.mulf %323, %327 : vector<8x32xf32>
    %329 = arith.mulf %328, %194 : vector<8x32xf32>
    %c48_105 = arith.constant 48 : index
    %c0_106 = arith.constant 0 : index
    %330 = vector.load %arg13[%c48_105, %c0_106] : memref<64x128xf32, #tpu.memory_space<vmem>>, vector<8x128xf32>
    %cst_107 = arith.constant dense<0.000000e+00> : vector<8x128xf32>
    %331 = tpu.matmul %329, %195, %cst_107 {dimension_numbers = #tpu.dot_dimension_numbers<[1], [0], [0], [1], [0, 0, 1, 1], [], []>} : vector<8x32xf32>, vector<32x128xf32>, vector<8x128xf32> -> vector<8x128xf32>
    %332 = arith.addf %330, %331 : vector<8x128xf32>
    %333 = arith.negf %332 : vector<8x128xf32>
    %334 = math.exp %333 : vector<8x128xf32>
    %cst_108 = arith.constant 1.000000e+00 : f32
    %335 = vector.broadcast %cst_108 : f32 to vector<8x128xf32>
    %336 = arith.addf %335, %334 : vector<8x128xf32>
    %337 = arith.divf %335, %336 : vector<8x128xf32>
    %338 = vector.extract_strided_slice %337 {offsets = [0, 0], sizes = [8, 32], strides = [1, 1]} : vector<8x128xf32> to vector<8x32xf32>
    %339 = vector.extract_strided_slice %337 {offsets = [0, 32], sizes = [8, 32], strides = [1, 1]} : vector<8x128xf32> to vector<8x32xf32>
    %340 = vector.extract_strided_slice %337 {offsets = [0, 64], sizes = [8, 32], strides = [1, 1]} : vector<8x128xf32> to vector<8x32xf32>
    %cst_109 = arith.constant 2.000000e+00 : f32
    %341 = vector.broadcast %cst_109 : f32 to vector<8x32xf32>
    %342 = arith.mulf %341, %340 : vector<8x32xf32>
    %cst_110 = arith.constant 1.000000e+00 : f32
    %343 = vector.broadcast %cst_110 : f32 to vector<8x32xf32>
    %344 = arith.subf %342, %343 : vector<8x32xf32>
    %345 = vector.extract_strided_slice %337 {offsets = [0, 96], sizes = [8, 32], strides = [1, 1]} : vector<8x128xf32> to vector<8x32xf32>
    %346 = arith.mulf %339, %326 : vector<8x32xf32>
    %347 = arith.mulf %338, %344 : vector<8x32xf32>
    %348 = arith.addf %346, %347 : vector<8x32xf32>
    %349 = math.tanh %348 : vector<8x32xf32>
    %350 = arith.mulf %345, %349 : vector<8x32xf32>
    %351 = arith.mulf %350, %194 : vector<8x32xf32>
    %c56_111 = arith.constant 56 : index
    %c0_112 = arith.constant 0 : index
    %352 = vector.load %arg13[%c56_111, %c0_112] : memref<64x128xf32, #tpu.memory_space<vmem>>, vector<8x128xf32>
    %cst_113 = arith.constant dense<0.000000e+00> : vector<8x128xf32>
    %353 = tpu.matmul %351, %195, %cst_113 {dimension_numbers = #tpu.dot_dimension_numbers<[1], [0], [0], [1], [0, 0, 1, 1], [], []>} : vector<8x32xf32>, vector<32x128xf32>, vector<8x128xf32> -> vector<8x128xf32>
    %354 = arith.addf %352, %353 : vector<8x128xf32>
    %355 = arith.negf %354 : vector<8x128xf32>
    %356 = math.exp %355 : vector<8x128xf32>
    %cst_114 = arith.constant 1.000000e+00 : f32
    %357 = vector.broadcast %cst_114 : f32 to vector<8x128xf32>
    %358 = arith.addf %357, %356 : vector<8x128xf32>
    %359 = arith.divf %357, %358 : vector<8x128xf32>
    %360 = vector.extract_strided_slice %359 {offsets = [0, 0], sizes = [8, 32], strides = [1, 1]} : vector<8x128xf32> to vector<8x32xf32>
    %361 = vector.extract_strided_slice %359 {offsets = [0, 32], sizes = [8, 32], strides = [1, 1]} : vector<8x128xf32> to vector<8x32xf32>
    %362 = vector.extract_strided_slice %359 {offsets = [0, 64], sizes = [8, 32], strides = [1, 1]} : vector<8x128xf32> to vector<8x32xf32>
    %cst_115 = arith.constant 2.000000e+00 : f32
    %363 = vector.broadcast %cst_115 : f32 to vector<8x32xf32>
    %364 = arith.mulf %363, %362 : vector<8x32xf32>
    %cst_116 = arith.constant 1.000000e+00 : f32
    %365 = vector.broadcast %cst_116 : f32 to vector<8x32xf32>
    %366 = arith.subf %364, %365 : vector<8x32xf32>
    %367 = vector.extract_strided_slice %359 {offsets = [0, 96], sizes = [8, 32], strides = [1, 1]} : vector<8x128xf32> to vector<8x32xf32>
    %368 = arith.mulf %361, %348 : vector<8x32xf32>
    %369 = arith.mulf %360, %366 : vector<8x32xf32>
    %370 = arith.addf %368, %369 : vector<8x32xf32>
    %371 = math.tanh %370 : vector<8x32xf32>
    %372 = arith.mulf %367, %371 : vector<8x32xf32>
    %373 = arith.mulf %372, %194 : vector<8x32xf32>
    %c0_117 = arith.constant 0 : index
    %c0_118 = arith.constant 0 : index
    %374 = vector.load %arg9[%c0_117, %c0_118] : memref<32x128xf32, #tpu.memory_space<vmem>>, vector<32x128xf32>
    %cst_119 = arith.constant dense<0.000000e+00> : vector<8x128xf32>
    %375 = tpu.matmul %373, %374, %cst_119 {dimension_numbers = #tpu.dot_dimension_numbers<[1], [0], [0], [1], [0, 0, 1, 1], [], []>} : vector<8x32xf32>, vector<32x128xf32>, vector<8x128xf32> -> vector<8x128xf32>
    %c0_120 = arith.constant 0 : index
    %c0_121 = arith.constant 0 : index
    %376 = vector.load %arg10[%c0_120, %c0_121] : memref<1x128xf32, #tpu.memory_space<vmem>>, vector<1x128xf32>
    %377 = vector.broadcast %376 : vector<1x128xf32> to vector<8x128xf32>
    %378 = arith.addf %375, %377 : vector<8x128xf32>
    %c0_122 = arith.constant 0 : index
    %c0_123 = arith.constant 0 : index
    %379 = vector.load %arg11[%c0_122, %c0_123] : memref<8x128xf32, #tpu.memory_space<vmem>>, vector<8x128xf32>
    tpu.vector_store %arg11[%c0_122, %c0_123], %378 {strides = array<i32>} : memref<8x128xf32, #tpu.memory_space<vmem>>, vector<8x128xf32>,
    return
  }
}

</mosaic_0001>

<llo_original>
// kernel: dualnet_market_forward.1
$region0: #{dualnet_market_forward.1}
  #allocation0 [shape = 'u32[]', space=smem, size = 0x4, offset = 0x4, fixed_abs, tag = 'smem constant byte address 0x4 - core index']
  #allocation1 [shape = 'u32[144,128]{1,0:T(1,128)}', space=vmem, size = 0x12000, scoped, tag = 'internal scratch']
  #allocation2 [shape = 'f32[64,128]{1,0:T(8,128)}', space=vmem, size = 0x8000, scoped, tag = 'scratch operand']
  #allocation3 [shape = 'f32[64,128]{1,0:T(8,128)}', space=vmem, size = 0x8000, scoped, tag = 'scratch operand']
  %s0 = inlined_call_operand.vmem [shape: f32[64,4], index: 0, kind: input, shape index: {}]
  %s1 = inlined_call_operand.vmem [shape: f32[4,128], index: 1, kind: input, shape index: {}]
  %s2 = inlined_call_operand.vmem [shape: f32[1,128], index: 2, kind: input, shape index: {}]
  %s3 = inlined_call_operand.vmem [shape: f32[32,128], index: 3, kind: input, shape index: {}]
  %s4 = inlined_call_operand.vmem [shape: f32[32,32], index: 4, kind: input, shape index: {}]
  %s5 = inlined_call_operand.vmem [shape: f32[1,32], index: 5, kind: input, shape index: {}]
  %s6 = inlined_call_operand.vmem [shape: f32[4,128], index: 6, kind: input, shape index: {}]
  %s7 = inlined_call_operand.vmem [shape: f32[1,128], index: 7, kind: input, shape index: {}]
  %s8 = inlined_call_operand.vmem [shape: f32[32,128], index: 8, kind: input, shape index: {}]
  %s9 = inlined_call_operand.vmem [shape: f32[32,128], index: 9, kind: input, shape index: {}]
  %s10 = inlined_call_operand.vmem [shape: f32[1,128], index: 10, kind: input, shape index: {}]
  %s11 = inlined_call_operand.vmem [shape: f32[8,128], index: 11, kind: output, shape index: {}]
  %s12 = sld [smem:[#allocation0]]
  $region54: #{dualnet_market_forward.1} parent=0
    _
  %s14 = ssub.s32 1, %s12
  %s15 = scalar_select 0, %s14, %s12
  // Predicated region
  $region2: #{dualnet_market_forward.1} parent=0 // pred_check
    _
  $region3: #{dualnet_market_forward.1} parent=0 // pred_check_branch
    %17 = sbr.rel (0) target = $region5
  $region4: #{dualnet_market_forward.1} parent=0 // pred_region
    _
  $region5: #{dualnet_market_forward.1} parent=0 // pred_fallthru
    _
  // Predicated region
  $region6: #{dualnet_market_forward.1} parent=0 // pred_check
    _
  $region7: #{dualnet_market_forward.1} parent=0 // pred_check_branch
    %19 = sbr.rel (0) target = $region9
  $region8: #{dualnet_market_forward.1} parent=0 // pred_region
    _
  $region9: #{dualnet_market_forward.1} parent=0 // pred_fallthru
    _
  // Predicated region
  $region10: #{dualnet_market_forward.1} parent=0 // pred_check
    _
  $region11: #{dualnet_market_forward.1} parent=0 // pred_check_branch
    %21 = sbr.rel (0) target = $region13
  $region12: #{dualnet_market_forward.1} parent=0 // pred_region
    _
  $region13: #{dualnet_market_forward.1} parent=0 // pred_fallthru
    _
  // Predicated region
  $region14: #{dualnet_market_forward.1} parent=0 // pred_check
    _
  $region15: #{dualnet_market_forward.1} parent=0 // pred_check_branch
    %23 = sbr.rel (0) target = $region17
  $region16: #{dualnet_market_forward.1} parent=0 // pred_region
    _
  $region17: #{dualnet_market_forward.1} parent=0 // pred_fallthru
    _
  // Predicated region
  $region18: #{dualnet_market_forward.1} parent=0 // pred_check
    _
  $region19: #{dualnet_market_forward.1} parent=0 // pred_check_branch
    %25 = sbr.rel (0) target = $region21
  $region20: #{dualnet_market_forward.1} parent=0 // pred_region
    _
  $region21: #{dualnet_market_forward.1} parent=0 // pred_fallthru
    _
  // Predicated region
  $region22: #{dualnet_market_forward.1} parent=0 // pred_check
    _
  $region23: #{dualnet_market_forward.1} parent=0 // pred_check_branch
    %27 = sbr.rel (0) target = $region25
  $region24: #{dualnet_market_forward.1} parent=0 // pred_region
    _
  $region25: #{dualnet_market_forward.1} parent=0 // pred_fallthru
    _
  // Predicated region
  $region26: #{dualnet_market_forward.1} parent=0 // pred_check
    _
  $region27: #{dualnet_market_forward.1} parent=0 // pred_check_branch
    %29 = sbr.rel (0) target = $region29
  $region28: #{dualnet_market_forward.1} parent=0 // pred_region
    _
  $region29: #{dualnet_market_forward.1} parent=0 // pred_fallthru
    _
  // Predicated region
  $region30: #{dualnet_market_forward.1} parent=0 // pred_check
    _
  $region31: #{dualnet_market_forward.1} parent=0 // pred_check_branch
    %31 = sbr.rel (0) target = $region33
  $region32: #{dualnet_market_forward.1} parent=0 // pred_region
    _
  $region33: #{dualnet_market_forward.1} parent=0 // pred_fallthru
    _
  // Predicated region
  $region34: #{dualnet_market_forward.1} parent=0 // pred_check
    _
  $region35: #{dualnet_market_forward.1} parent=0 // pred_check_branch
    %33 = sbr.rel (0) target = $region37
  $region36: #{dualnet_market_forward.1} parent=0 // pred_region
    _
  $region37: #{dualnet_market_forward.1} parent=0 // pred_fallthru
    _
  // Predicated region
  $region38: #{dualnet_market_forward.1} parent=0 // pred_check
    _
  $region39: #{dualnet_market_forward.1} parent=0 // pred_check_branch
    %35 = sbr.rel (0) target = $region41
  $region40: #{dualnet_market_forward.1} parent=0 // pred_region
    _
  $region41: #{dualnet_market_forward.1} parent=0 // pred_fallthru
    _
  // Predicated region
  $region42: #{dualnet_market_forward.1} parent=0 // pred_check
    _
  $region43: #{dualnet_market_forward.1} parent=0 // pred_check_branch
    %37 = sbr.rel (0) target = $region45
  $region44: #{dualnet_market_forward.1} parent=0 // pred_region
    _
  $region45: #{dualnet_market_forward.1} parent=0 // pred_fallthru
    _
  %v38 = vld [vmem:[%s0] sm:$0xff]
  %v39 = vld [vmem:[%s0 + $0x8] sm:$0xff]
  %v40 = vld [vmem:[%s0 + $0x10] sm:$0xff]
  %v41 = vld [vmem:[%s0 + $0x18] sm:$0xff]
  %v42 = vld [vmem:[%s0 + $0x20] sm:$0xff]
  %v43 = vld [vmem:[%s0 + $0x28] sm:$0xff]
  %v44 = vld [vmem:[%s0 + $0x30] sm:$0xff]
  %v45 = vld [vmem:[%s0 + $0x38] sm:$0xff]
  %v46 = vld [vmem:[%s1] sm:$0xf]
  %v47 = vld [vmem:[%s2] sm:$0x1]
  %v49 = vlaneseq
  %v50 = vshrl.u32 %v49, 7
  %v51 = vsub.s32 0, %v50
  %v52 = vrot.slane %v47, %v51
  %vm54 = vcmask 31744
  %v56 = vsel %vm54, %v38, 0
  %v59 = vsel %vm54, %v39, 0
  %v62 = vsel %vm54, %v40, 0
  %v65 = vsel %vm54, %v41, 0
  %v68 = vsel %vm54, %v42, 0
  %v71 = vsel %vm54, %v43, 0
  %v74 = vsel %vm54, %v44, 0
  %v77 = vsel %vm54, %v45, 0
  %vm79 = vcmask 1043456
  %v81 = vsel %vm79, %v46, 0
  %83 = vmatprep.subr.mxu0 0.0
  %84 = vmatpush1.msra.mxu0 %v81
  %85 = vmatprep.subr.mxu0 0.0
  %86 = vmatpush1.msra.mxu0 0.0
  %87 = vmatprep.subr.mxu0 0.0
  %88 = vmatpush1.msra.mxu0 0.0
  %89 = vmatprep.subr.mxu0 0.0
  %90 = vmatpush1.msra.mxu0 0.0
  %91 = vmatprep.subr.mxu0 0.0
  %92 = vmatpush1.msra.mxu0 0.0
  %93 = vmatprep.subr.mxu0 0.0
  %94 = vmatpush1.msra.mxu0 0.0
  %95 = vmatprep.subr.mxu0 0.0
  %96 = vmatpush1.msra.mxu0 0.0
  %97 = vmatprep.subr.mxu0 0.0
  %98 = vmatpush1.msra.mxu0 0.0
  %99 = vmatprep.subr.mxu0 0.0
  %100 = vmatpush1.msra.mxu0 0.0
  %101 = vmatprep.subr.mxu0 0.0
  %102 = vmatpush1.msra.mxu0 0.0
  %103 = vmatprep.subr.mxu0 0.0
  %104 = vmatpush1.msra.mxu0 0.0
  %105 = vmatprep.subr.mxu0 0.0
  %106 = vmatpush1.msra.mxu0 0.0
  %107 = vmatprep.subr.mxu0 0.0
  %108 = vmatpush1.msra.mxu0 0.0
  %109 = vmatprep.subr.mxu0 0.0
  %110 = vmatpush1.msra.mxu0 0.0
  %111 = vmatprep.subr.mxu0 0.0
  %112 = vmatpush1.msra.mxu0 0.0
  %113 = vmatprep.subr.mxu0 0.0
  %114 = vmatpush1.msra.mxu0 0.0
  %115 = vmatprep.subr.mxu0 0.0
  %116 = vmatpush1.msra.mxu0 0.0
  %117 = vmatprep.subr.mxu0 0.0
  %118 = vmatpush1.msra.mxu0 0.0
  %119 = vmatprep.subr.mxu0 0.0
  %120 = vmatpush1.msra.mxu0 0.0
  %121 = vmatprep.subr.mxu0 0.0
  %122 = vmatpush1.msra.mxu0 0.0
  %123 = vmatprep.subr.mxu0 0.0
  %124 = vmatpush1.msra.mxu0 0.0
  %125 = vmatprep.subr.mxu0 0.0
  %126 = vmatpush1.msra.mxu0 0.0
  %127 = vmatprep.subr.mxu0 0.0
  %128 = vmatpush1.msra.mxu0 0.0
  %129 = vmatprep.subr.mxu0 0.0
  %130 = vmatpush1.msra.mxu0 0.0
  %131 = vmatprep.subr.mxu0 0.0
  %132 = vmatpush1.msra.mxu0 0.0
  %133 = vmatprep.subr.mxu0 0.0
  %134 = vmatpush1.msra.mxu0 0.0
  %135 = vmatprep.subr.mxu0 0.0
  %136 = vmatpush1.msra.mxu0 0.0
  %137 = vmatprep.subr.mxu0 0.0
  %138 = vmatpush1.msra.mxu0 0.0
  %139 = vmatprep.subr.mxu0 0.0
  %140 = vmatpush1.msra.mxu0 0.0
  %141 = vmatprep.subr.mxu0 0.0
  %142 = vmatpush1.msra.mxu0 0.0
  %143 = vmatprep.subr.mxu0 0.0
  %144 = vmatpush1.msra.mxu0 0.0
  %145 = vmatprep.subr.mxu0 0.0
  %146 = vmatpush1.msra.mxu0 0.0
  %147 = vmatprep.mubr.f32.mxu0 0.0
  %148 = vmatmul.mubr.f32.gmra.mrb[0].mxu0 %v56
  %v149 = vpop.f32.mrb[0].mxu0
  %v150 = vadd.f32 %v52, %v149
  %v151 = vpop.f32.mrb[0].mxu0
  %152 = vmatprep.mubr.f32.mxu0 0.0
  %153 = vmatmul.mubr.f32.gmra.mrb[0].mxu0 %v59
  %v154 = vpop.f32.mrb[0].mxu0
  %v155 = vadd.f32 %v52, %v154
  %v156 = vpop.f32.mrb[0].mxu0
  %157 = vmatprep.mubr.f32.mxu0 0.0
  %158 = vmatmul.mubr.f32.gmra.mrb[0].mxu0 %v62
  %v159 = vpop.f32.mrb[0].mxu0
  %v160 = vadd.f32 %v52, %v159
  %v161 = vpop.f32.mrb[0].mxu0
  %162 = vmatprep.mubr.f32.mxu0 0.0
  %163 = vmatmul.mubr.f32.gmra.mrb[0].mxu0 %v65
  %v164 = vpop.f32.mrb[0].mxu0
  %v165 = vadd.f32 %v52, %v164
  %v166 = vpop.f32.mrb[0].mxu0
  %167 = vmatprep.mubr.f32.mxu0 0.0
  %168 = vmatmul.mubr.f32.gmra.mrb[0].mxu0 %v68
  %v169 = vpop.f32.mrb[0].mxu0
  %v170 = vadd.f32 %v52, %v169
  %v171 = vpop.f32.mrb[0].mxu0
  %172 = vmatprep.mubr.f32.mxu0 0.0
  %173 = vmatmul.mubr.f32.gmra.mrb[0].mxu0 %v71
  %v174 = vpop.f32.mrb[0].mxu0
  %v175 = vadd.f32 %v52, %v174
  %v176 = vpop.f32.mrb[0].mxu0
  %177 = vmatprep.mubr.f32.mxu0 0.0
  %178 = vmatmul.mubr.f32.gmra.mrb[0].mxu0 %v74
  %v179 = vpop.f32.mrb[0].mxu0
  %v180 = vadd.f32 %v52, %v179
  %v181 = vpop.f32.mrb[0].mxu0
  %182 = vmatprep.mubr.f32.mxu0 0.0
  %183 = vmatmul.mubr.f32.gmra.mrb[0].mxu0 %v77
  %v184 = vpop.f32.mrb[0].mxu0
  %v185 = vadd.f32 %v52, %v184
  %v186 = vpop.f32.mrb[0].mxu0
  %187 = vdwg.mxu0
  %188 = vst [vmem:[#allocation2] sm:$0xff] %v150
  %189 = vst [vmem:[#allocation2 + $0x8] sm:$0xff] %v155
  %190 = vst [vmem:[#allocation2 + $0x10] sm:$0xff] %v160
  %191 = vst [vmem:[#allocation2 + $0x18] sm:$0xff] %v165
  %192 = vst [vmem:[#allocation2 + $0x20] sm:$0xff] %v170
  %193 = vst [vmem:[#allocation2 + $0x28] sm:$0xff] %v175
  %194 = vst [vmem:[#allocation2 + $0x30] sm:$0xff] %v180
  %195 = vst [vmem:[#allocation2 + $0x38] sm:$0xff] %v185
  %v196 = vld [vmem:[%s6] sm:$0xf]
  %v197 = vld [vmem:[%s7] sm:$0x1]
  %v199 = vlaneseq
  %v200 = vshrl.u32 %v199, 7
  %v201 = vsub.s32 0, %v200
  %v202 = vrot.slane %v197, %v201
  %v205 = vsel %vm79, %v196, 0
  %207 = vmatprep.subr.mxu0 0.0
  %208 = vmatpush1.msra.mxu0 %v205
  %209 = vmatprep.subr.mxu0 0.0
  %210 = vmatpush1.msra.mxu0 0.0
  %211 = vmatprep.subr.mxu0 0.0
  %212 = vmatpush1.msra.mxu0 0.0
  %213 = vmatprep.subr.mxu0 0.0
  %214 = vmatpush1.msra.mxu0 0.0
  %215 = vmatprep.subr.mxu0 0.0
  %216 = vmatpush1.msra.mxu0 0.0
  %217 = vmatprep.subr.mxu0 0.0
  %218 = vmatpush1.msra.mxu0 0.0
  %219 = vmatprep.subr.mxu0 0.0
  %220 = vmatpush1.msra.mxu0 0.0
  %221 = vmatprep.subr.mxu0 0.0
  %222 = vmatpush1.msra.mxu0 0.0
  %223 = vmatprep.subr.mxu0 0.0
  %224 = vmatpush1.msra.mxu0 0.0
  %225 = vmatprep.subr.mxu0 0.0
  %226 = vmatpush1.msra.mxu0 0.0
  %227 = vmatprep.subr.mxu0 0.0
  %228 = vmatpush1.msra.mxu0 0.0
  %229 = vmatprep.subr.mxu0 0.0
  %230 = vmatpush1.msra.mxu0 0.0
  %231 = vmatprep.subr.mxu0 0.0
  %232 = vmatpush1.msra.mxu0 0.0
  %233 = vmatprep.subr.mxu0 0.0
  %234 = vmatpush1.msra.mxu0 0.0
  %235 = vmatprep.subr.mxu0 0.0
  %236 = vmatpush1.msra.mxu0 0.0
  %237 = vmatprep.subr.mxu0 0.0
  %238 = vmatpush1.msra.mxu0 0.0
  %239 = vmatprep.subr.mxu0 0.0
  %240 = vmatpush1.msra.mxu0 0.0
  %241 = vmatprep.subr.mxu0 0.0
  %242 = vmatpush1.msra.mxu0 0.0
  %243 = vmatprep.subr.mxu0 0.0
  %244 = vmatpush1.msra.mxu0 0.0
  %245 = vmatprep.subr.mxu0 0.0
  %246 = vmatpush1.msra.mxu0 0.0
  %247 = vmatprep.subr.mxu0 0.0
  %248 = vmatpush1.msra.mxu0 0.0
  %249 = vmatprep.subr.mxu0 0.0
  %250 = vmatpush1.msra.mxu0 0.0
  %251 = vmatprep.subr.mxu0 0.0
  %252 = vmatpush1.msra.mxu0 0.0
  %253 = vmatprep.subr.mxu0 0.0
  %254 = vmatpush1.msra.mxu0 0.0
  %255 = vmatprep.subr.mxu0 0.0
  %256 = vmatpush1.msra.mxu0 0.0
  %257 = vmatprep.subr.mxu0 0.0
  %258 = vmatpush1.msra.mxu0 0.0
  %259 = vmatprep.subr.mxu0 0.0
  %260 = vmatpush1.msra.mxu0 0.0
  %261 = vmatprep.subr.mxu0 0.0
  %262 = vmatpush1.msra.mxu0 0.0
  %263 = vmatprep.subr.mxu0 0.0
  %264 = vmatpush1.msra.mxu0 0.0
  %265 = vmatprep.subr.mxu0 0.0
  %266 = vmatpush1.msra.mxu0 0.0
  %267 = vmatprep.subr.mxu0 0.0
  %268 = vmatpush1.msra.mxu0 0.0
  %269 = vmatprep.subr.mxu0 0.0
  %270 = vmatpush1.msra.mxu0 0.0
  %271 = vmatprep.mubr.f32.mxu0 0.0
  %272 = vmatmul.mubr.f32.gmra.mrb[0].mxu0 %v56
  %v273 = vpop.f32.mrb[0].mxu0
  %v274 = vadd.f32 %v202, %v273
  %v275 = vpop.f32.mrb[0].mxu0
  %276 = vmatprep.mubr.f32.mxu0 0.0
  %277 = vmatmul.mubr.f32.gmra.mrb[0].mxu0 %v59
  %v278 = vpop.f32.mrb[0].mxu0
  %v279 = vadd.f32 %v202, %v278
  %v280 = vpop.f32.mrb[0].mxu0
  %281 = vmatprep.mubr.f32.mxu0 0.0
  %282 = vmatmul.mubr.f32.gmra.mrb[0].mxu0 %v62
  %v283 = vpop.f32.mrb[0].mxu0
  %v284 = vadd.f32 %v202, %v283
  %v285 = vpop.f32.mrb[0].mxu0
  %286 = vmatprep.mubr.f32.mxu0 0.0
  %287 = vmatmul.mubr.f32.gmra.mrb[0].mxu0 %v65
  %v288 = vpop.f32.mrb[0].mxu0
  %v289 = vadd.f32 %v202, %v288
  %v290 = vpop.f32.mrb[0].mxu0
  %291 = vmatprep.mubr.f32.mxu0 0.0
  %292 = vmatmul.mubr.f32.gmra.mrb[0].mxu0 %v68
  %v293 = vpop.f32.mrb[0].mxu0
  %v294 = vadd.f32 %v202, %v293
  %v295 = vpop.f32.mrb[0].mxu0
  %296 = vmatprep.mubr.f32.mxu0 0.0
  %297 = vmatmul.mubr.f32.gmra.mrb[0].mxu0 %v71
  %v298 = vpop.f32.mrb[0].mxu0
  %v299 = vadd.f32 %v202, %v298
  %v300 = vpop.f32.mrb[0].mxu0
  %301 = vmatprep.mubr.f32.mxu0 0.0
  %302 = vmatmul.mubr.f32.gmra.mrb[0].mxu0 %v74
  %v303 = vpop.f32.mrb[0].mxu0
  %v304 = vadd.f32 %v202, %v303
  %v305 = vpop.f32.mrb[0].mxu0
  %306 = vmatprep.mubr.f32.mxu0 0.0
  %307 = vmatmul.mubr.f32.gmra.mrb[0].mxu0 %v77
  %v308 = vpop.f32.mrb[0].mxu0
  %v309 = vadd.f32 %v202, %v308
  %v310 = vpop.f32.mrb[0].mxu0
  %311 = vdwg.mxu0
  %312 = vst [vmem:[#allocation3] sm:$0xff] %v274
  %313 = vst [vmem:[#allocation3 + $0x8] sm:$0xff] %v279
  %314 = vst [vmem:[#allocation3 + $0x10] sm:$0xff] %v284
  %315 = vst [vmem:[#allocation3 + $0x18] sm:$0xff] %v289
  %316 = vst [vmem:[#allocation3 + $0x20] sm:$0xff] %v294
  %317 = vst [vmem:[#allocation3 + $0x28] sm:$0xff] %v299
  %318 = vst [vmem:[#allocation3 + $0x30] sm:$0xff] %v304
  %319 = vst [vmem:[#allocation3 + $0x38] sm:$0xff] %v309
  %v320 = vld [vmem:[%s3] sm:$0xff]
  %v321 = vld [vmem:[%s3 + $0x8] sm:$0xff]
  %v322 = vld [vmem:[%s3 + $0x10] sm:$0xff]
  %v323 = vld [vmem:[%s3 + $0x18] sm:$0xff]
  %v324 = vld [vmem:[#allocation2] sm:$0xff]
  %vm325 = vcmask 261120
  %v327 = vsel %vm325, 0.0, 0
  %329 = vmatprep.subr.mxu0 0.0
  %330 = vmatpush1.msra.mxu0 %v320
  %331 = vmatprep.subr.mxu0 0.0
  %332 = vmatpush1.msra.mxu0 %v321
  %333 = vmatprep.subr.mxu0 0.0
  %334 = vmatpush1.msra.mxu0 %v322
  %335 = vmatprep.subr.mxu0 0.0
  %336 = vmatpush1.msra.mxu0 %v323
  %337 = vmatprep.subr.mxu0 0.0
  %338 = vmatpush1.msra.mxu0 0.0
  %339 = vmatprep.subr.mxu0 0.0
  %340 = vmatpush1.msra.mxu0 0.0
  %341 = vmatprep.subr.mxu0 0.0
  %342 = vmatpush1.msra.mxu0 0.0
  %343 = vmatprep.subr.mxu0 0.0
  %344 = vmatpush1.msra.mxu0 0.0
  %345 = vmatprep.subr.mxu0 0.0
  %346 = vmatpush1.msra.mxu0 0.0
  %347 = vmatprep.subr.mxu0 0.0
  %348 = vmatpush1.msra.mxu0 0.0
  %349 = vmatprep.subr.mxu0 0.0
  %350 = vmatpush1.msra.mxu0 0.0
  %351 = vmatprep.subr.mxu0 0.0
  %352 = vmatpush1.msra.mxu0 0.0
  %353 = vmatprep.subr.mxu0 0.0
  %354 = vmatpush1.msra.mxu0 0.0
  %355 = vmatprep.subr.mxu0 0.0
  %356 = vmatpush1.msra.mxu0 0.0
  %357 = vmatprep.subr.mxu0 0.0
  %358 = vmatpush1.msra.mxu0 0.0
  %359 = vmatprep.subr.mxu0 0.0
  %360 = vmatpush1.msra.mxu0 0.0
  %361 = vmatprep.subr.mxu0 0.0
  %362 = vmatpush1.msra.mxu0 0.0
  %363 = vmatprep.subr.mxu0 0.0
  %364 = vmatpush1.msra.mxu0 0.0
  %365 = vmatprep.subr.mxu0 0.0
  %366 = vmatpush1.msra.mxu0 0.0
  %367 = vmatprep.subr.mxu0 0.0
  %368 = vmatpush1.msra.mxu0 0.0
  %369 = vmatprep.subr.mxu0 0.0
  %370 = vmatpush1.msra.mxu0 0.0
  %371 = vmatprep.subr.mxu0 0.0
  %372 = vmatpush1.msra.mxu0 0.0
  %373 = vmatprep.subr.mxu0 0.0
  %374 = vmatpush1.msra.mxu0 0.0
  %375 = vmatprep.subr.mxu0 0.0
  %376 = vmatpush1.msra.mxu0 0.0
  %377 = vmatprep.subr.mxu0 0.0
  %378 = vmatpush1.msra.mxu0 0.0
  %379 = vmatprep.subr.mxu0 0.0
  %380 = vmatpush1.msra.mxu0 0.0
  %381 = vmatprep.subr.mxu0 0.0
  %382 = vmatpush1.msra.mxu0 0.0
  %383 = vmatprep.subr.mxu0 0.0
  %384 = vmatpush1.msra.mxu0 0.0
  %385 = vmatprep.subr.mxu0 0.0
  %386 = vmatpush1.msra.mxu0 0.0
  %387 = vmatprep.subr.mxu0 0.0
  %388 = vmatpush1.msra.mxu0 0.0
  %389 = vmatprep.subr.mxu0 0.0
  %390 = vmatpush1.msra.mxu0 0.0
  %391 = vmatprep.subr.mxu0 0.0
  %392 = vmatpush1.msra.mxu0 0.0
  %393 = vmatprep.mubr.f32.mxu0 0.0
  %394 = vmatmul.mubr.f32.gmra.mrb[0].mxu0 %v327
  %v395 = vpop.f32.mrb[0].mxu0
  %v396 = vadd.f32 0.0, %v395
  %v397 = vpop.f32.mrb[0].mxu0
  %398 = vdwg.mxu0
  %v399 = vadd.f32 %v324, %v396
  %v400 = vxor.u32 %v399, 2147483648
  %v401 = vmul.f32 %v400, 1.442695
  %v402 = vpow.pop %v401
  %v403 = vadd.f32 %v402, 1.0
  %v404 = vrcp.pop %v403
  %v405 = vmul.f32 1.0, %v404
  %v406 = vmul.f32 %v405, 2.0
  %v407 = vsub.f32 %v406, 1.0
  %v408 = vmul.f32 %v405, 0.0
  %410 = vrot.lane.b32.xlu0 %v407, 64
  %v411 = vpop.permute.xlu0 %410
  %v413 = vmul.f32 %v405, %v411
  %415 = vrot.lane.b32.xlu0 %v413, 32
  %v416 = vpop.permute.xlu0 %415
  %v418 = vadd.f32 %v408, %v416
  %v419 = vtanh.pop %v418
  %421 = vrot.lane.b32.xlu0 %v419, 64
  %v422 = vpop.permute.xlu0 %421
  %v424 = vmul.f32 %v405, %v422
  %v425 = vld [vmem:[#allocation2 + $0x8] sm:$0xff]
  %427 = vrot.lane.b32.xlu0 %v424, 32
  %v428 = vpop.permute.xlu0 %427
  %v429 = vsel %vm325, %v428, 0
  %431 = vmatprep.subr.mxu0 0.0
  %432 = vmatpush1.msra.mxu0 %v320
  %433 = vmatprep.subr.mxu0 0.0
  %434 = vmatpush1.msra.mxu0 %v321
  %435 = vmatprep.subr.mxu0 0.0
  %436 = vmatpush1.msra.mxu0 %v322
  %437 = vmatprep.subr.mxu0 0.0
  %438 = vmatpush1.msra.mxu0 %v323
  %439 = vmatprep.subr.mxu0 0.0
  %440 = vmatpush1.msra.mxu0 0.0
  %441 = vmatprep.subr.mxu0 0.0
  %442 = vmatpush1.msra.mxu0 0.0
  %443 = vmatprep.subr.mxu0 0.0
  %444 = vmatpush1.msra.mxu0 0.0
  %445 = vmatprep.subr.mxu0 0.0
  %446 = vmatpush1.msra.mxu0 0.0
  %447 = vmatprep.subr.mxu0 0.0
  %448 = vmatpush1.msra.mxu0 0.0
  %449 = vmatprep.subr.mxu0 0.0
  %450 = vmatpush1.msra.mxu0 0.0
  %451 = vmatprep.subr.mxu0 0.0
  %452 = vmatpush1.msra.mxu0 0.0
  %453 = vmatprep.subr.mxu0 0.0
  %454 = vmatpush1.msra.mxu0 0.0
  %455 = vmatprep.subr.mxu0 0.0
  %456 = vmatpush1.msra.mxu0 0.0
  %457 = vmatprep.subr.mxu0 0.0
  %458 = vmatpush1.msra.mxu0 0.0
  %459 = vmatprep.subr.mxu0 0.0
  %460 = vmatpush1.msra.mxu0 0.0
  %461 = vmatprep.subr.mxu0 0.0
  %462 = vmatpush1.msra.mxu0 0.0
  %463 = vmatprep.subr.mxu0 0.0
  %464 = vmatpush1.msra.mxu0 0.0
  %465 = vmatprep.subr.mxu0 0.0
  %466 = vmatpush1.msra.mxu0 0.0
  %467 = vmatprep.subr.mxu0 0.0
  %468 = vmatpush1.msra.mxu0 0.0
  %469 = vmatprep.subr.mxu0 0.0
  %470 = vmatpush1.msra.mxu0 0.0
  %471 = vmatprep.subr.mxu0 0.0
  %472 = vmatpush1.msra.mxu0 0.0
  %473 = vmatprep.subr.mxu0 0.0
  %474 = vmatpush1.msra.mxu0 0.0
  %475 = vmatprep.subr.mxu0 0.0
  %476 = vmatpush1.msra.mxu0 0.0
  %477 = vmatprep.subr.mxu0 0.0
  %478 = vmatpush1.msra.mxu0 0.0
  %479 = vmatprep.subr.mxu0 0.0
  %480 = vmatpush1.msra.mxu0 0.0
  %481 = vmatprep.subr.mxu0 0.0
  %482 = vmatpush1.msra.mxu0 0.0
  %483 = vmatprep.subr.mxu0 0.0
  %484 = vmatpush1.msra.mxu0 0.0
  %485 = vmatprep.subr.mxu0 0.0
  %486 = vmatpush1.msra.mxu0 0.0
  %487 = vmatprep.subr.mxu0 0.0
  %488 = vmatpush1.msra.mxu0 0.0
  %489 = vmatprep.subr.mxu0 0.0
  %490 = vmatpush1.msra.mxu0 0.0
  %491 = vmatprep.subr.mxu0 0.0
  %492 = vmatpush1.msra.mxu0 0.0
  %493 = vmatprep.subr.mxu0 0.0
  %494 = vmatpush1.msra.mxu0 0.0
  %495 = vmatprep.mubr.f32.mxu0 0.0
  %496 = vmatmul.mubr.f32.gmra.mrb[0].mxu0 %v429
  %v497 = vpop.f32.mrb[0].mxu0
  %v498 = vadd.f32 0.0, %v497
  %v499 = vpop.f32.mrb[0].mxu0
  %500 = vdwg.mxu0
  %v501 = vadd.f32 %v425, %v498
  %v502 = vxor.u32 %v501, 2147483648
  %v503 = vmul.f32 %v502, 1.442695
  %v504 = vpow.pop %v503
  %v505 = vadd.f32 %v504, 1.0
  %v506 = vrcp.pop %v505
  %v507 = vmul.f32 1.0, %v506
  %v508 = vmul.f32 %v507, 2.0
  %v509 = vsub.f32 %v508, 1.0
  %v510 = vmul.f32 %v507, %v418
  %512 = vrot.lane.b32.xlu0 %v509, 64
  %v513 = vpop.permute.xlu0 %512
  %v515 = vmul.f32 %v507, %v513
  %517 = vrot.lane.b32.xlu0 %v515, 32
  %v518 = vpop.permute.xlu0 %517
  %v520 = vadd.f32 %v510, %v518
  %v521 = vtanh.pop %v520
  %523 = vrot.lane.b32.xlu0 %v521, 64
  %v524 = vpop.permute.xlu0 %523
  %v526 = vmul.f32 %v507, %v524
  %v527 = vld [vmem:[#allocation2 + $0x10] sm:$0xff]
  %529 = vrot.lane.b32.xlu0 %v526, 32
  %v530 = vpop.permute.xlu0 %529
  %v531 = vsel %vm325, %v530, 0
  %533 = vmatprep.subr.mxu0 0.0
  %534 = vmatpush1.msra.mxu0 %v320
  %535 = vmatprep.subr.mxu0 0.0
  %536 = vmatpush1.msra.mxu0 %v321
  %537 = vmatprep.subr.mxu0 0.0
  %538 = vmatpush1.msra.mxu0 %v322
  %539 = vmatprep.subr.mxu0 0.0
  %540 = vmatpush1.msra.mxu0 %v323
  %541 = vmatprep.subr.mxu0 0.0
  %542 = vmatpush1.msra.mxu0 0.0
  %543 = vmatprep.subr.mxu0 0.0
  %544 = vmatpush1.msra.mxu0 0.0
  %545 = vmatprep.subr.mxu0 0.0
  %546 = vmatpush1.msra.mxu0 0.0
  %547 = vmatprep.subr.mxu0 0.0
  %548 = vmatpush1.msra.mxu0 0.0
  %549 = vmatprep.subr.mxu0 0.0
  %550 = vmatpush1.msra.mxu0 0.0
  %551 = vmatprep.subr.mxu0 0.0
  %552 = vmatpush1.msra.mxu0 0.0
  %553 = vmatprep.subr.mxu0 0.0
  %554 = vmatpush1.msra.mxu0 0.0
  %555 = vmatprep.subr.mxu0 0.0
  %556 = vmatpush1.msra.mxu0 0.0
  %557 = vmatprep.subr.mxu0 0.0
  %558 = vmatpush1.msra.mxu0 0.0
  %559 = vmatprep.subr.mxu0 0.0
  %560 = vmatpush1.msra.mxu0 0.0
  %561 = vmatprep.subr.mxu0 0.0
  %562 = vmatpush1.msra.mxu0 0.0
  %563 = vmatprep.subr.mxu0 0.0
  %564 = vmatpush1.msra.mxu0 0.0
  %565 = vmatprep.subr.mxu0 0.0
  %566 = vmatpush1.msra.mxu0 0.0
  %567 = vmatprep.subr.mxu0 0.0
  %568 = vmatpush1.msra.mxu0 0.0
  %569 = vmatprep.subr.mxu0 0.0
  %570 = vmatpush1.msra.mxu0 0.0
  %571 = vmatprep.subr.mxu0 0.0
  %572 = vmatpush1.msra.mxu0 0.0
  %573 = vmatprep.subr.mxu0 0.0
  %574 = vmatpush1.msra.mxu0 0.0
  %575 = vmatprep.subr.mxu0 0.0
  %576 = vmatpush1.msra.mxu0 0.0
  %577 = vmatprep.subr.mxu0 0.0
  %578 = vmatpush1.msra.mxu0 0.0
  %579 = vmatprep.subr.mxu0 0.0
  %580 = vmatpush1.msra.mxu0 0.0
  %581 = vmatprep.subr.mxu0 0.0
  %582 = vmatpush1.msra.mxu0 0.0
  %583 = vmatprep.subr.mxu0 0.0
  %584 = vmatpush1.msra.mxu0 0.0
  %585 = vmatprep.subr.mxu0 0.0
  %586 = vmatpush1.msra.mxu0 0.0
  %587 = vmatprep.subr.mxu0 0.0
  %588 = vmatpush1.msra.mxu0 0.0
  %589 = vmatprep.subr.mxu0 0.0
  %590 = vmatpush1.msra.mxu0 0.0
  %591 = vmatprep.subr.mxu0 0.0
  %592 = vmatpush1.msra.mxu0 0.0
  %593 = vmatprep.subr.mxu0 0.0
  %594 = vmatpush1.msra.mxu0 0.0
  %595 = vmatprep.subr.mxu0 0.0
  %596 = vmatpush1.msra.mxu0 0.0
  %597 = vmatprep.mubr.f32.mxu0 0.0
  %598 = vmatmul.mubr.f32.gmra.mrb[0].mxu0 %v531
  %v599 = vpop.f32.mrb[0].mxu0
  %v600 = vadd.f32 0.0, %v599
  %v601 = vpop.f32.mrb[0].mxu0
  %602 = vdwg.mxu0
  %v603 = vadd.f32 %v527, %v600
  %v604 = vxor.u32 %v603, 2147483648
  %v605 = vmul.f32 %v604, 1.442695
  %v606 = vpow.pop %v605
  %v607 = vadd.f32 %v606, 1.0
  %v608 = vrcp.pop %v607
  %v609 = vmul.f32 1.0, %v608
  %v610 = vmul.f32 %v609, 2.0
  %v611 = vsub.f32 %v610, 1.0
  %v612 = vmul.f32 %v609, %v520
  %614 = vrot.lane.b32.xlu0 %v611, 64
  %v615 = vpop.permute.xlu0 %614
  %v617 = vmul.f32 %v609, %v615
  %619 = vrot.lane.b32.xlu0 %v617, 32
  %v620 = vpop.permute.xlu0 %619
  %v622 = vadd.f32 %v612, %v620
  %v623 = vtanh.pop %v622
  %625 = vrot.lane.b32.xlu0 %v623, 64
  %v626 = vpop.permute.xlu0 %625
  %v628 = vmul.f32 %v609, %v626
  %v629 = vld [vmem:[#allocation2 + $0x18] sm:$0xff]
  %631 = vrot.lane.b32.xlu0 %v628, 32
  %v632 = vpop.permute.xlu0 %631
  %v633 = vsel %vm325, %v632, 0
  %635 = vmatprep.subr.mxu0 0.0
  %636 = vmatpush1.msra.mxu0 %v320
  %637 = vmatprep.subr.mxu0 0.0
  %638 = vmatpush1.msra.mxu0 %v321
  %639 = vmatprep.subr.mxu0 0.0
  %640 = vmatpush1.msra.mxu0 %v322
  %641 = vmatprep.subr.mxu0 0.0
  %642 = vmatpush1.msra.mxu0 %v323
  %643 = vmatprep.subr.mxu0 0.0
  %644 = vmatpush1.msra.mxu0 0.0
  %645 = vmatprep.subr.mxu0 0.0
  %646 = vmatpush1.msra.mxu0 0.0
  %647 = vmatprep.subr.mxu0 0.0
  %648 = vmatpush1.msra.mxu0 0.0
  %649 = vmatprep.subr.mxu0 0.0
  %650 = vmatpush1.msra.mxu0 0.0
  %651 = vmatprep.subr.mxu0 0.0
  %652 = vmatpush1.msra.mxu0 0.0
  %653 = vmatprep.subr.mxu0 0.0
  %654 = vmatpush1.msra.mxu0 0.0
  %655 = vmatprep.subr.mxu0 0.0
  %656 = vmatpush1.msra.mxu0 0.0
  %657 = vmatprep.subr.mxu0 0.0
  %658 = vmatpush1.msra.mxu0 0.0
  %659 = vmatprep.subr.mxu0 0.0
  %660 = vmatpush1.msra.mxu0 0.0
  %661 = vmatprep.subr.mxu0 0.0
  %662 = vmatpush1.msra.mxu0 0.0
  %663 = vmatprep.subr.mxu0 0.0
  %664 = vmatpush1.msra.mxu0 0.0
  %665 = vmatprep.subr.mxu0 0.0
  %666 = vmatpush1.msra.mxu0 0.0
  %667 = vmatprep.subr.mxu0 0.0
  %668 = vmatpush1.msra.mxu0 0.0
  %669 = vmatprep.subr.mxu0 0.0
  %670 = vmatpush1.msra.mxu0 0.0
  %671 = vmatprep.subr.mxu0 0.0
  %672 = vmatpush1.msra.mxu0 0.0
  %673 = vmatprep.subr.mxu0 0.0
  %674 = vmatpush1.msra.mxu0 0.0
  %675 = vmatprep.subr.mxu0 0.0
  %676 = vmatpush1.msra.mxu0 0.0
  %677 = vmatprep.subr.mxu0 0.0
  %678 = vmatpush1.msra.mxu0 0.0
  %679 = vmatprep.subr.mxu0 0.0
  %680 = vmatpush1.msra.mxu0 0.0
  %681 = vmatprep.subr.mxu0 0.0
  %682 = vmatpush1.msra.mxu0 0.0
  %683 = vmatprep.subr.mxu0 0.0
  %684 = vmatpush1.msra.mxu0 0.0
  %685 = vmatprep.subr.mxu0 0.0
  %686 = vmatpush1.msra.mxu0 0.0
  %687 = vmatprep.subr.mxu0 0.0
  %688 = vmatpush1.msra.mxu0 0.0
  %689 = vmatprep.subr.mxu0 0.0
  %690 = vmatpush1.msra.mxu0 0.0
  %691 = vmatprep.subr.mxu0 0.0
  %692 = vmatpush1.msra.mxu0 0.0
  %693 = vmatprep.subr.mxu0 0.0
  %694 = vmatpush1.msra.mxu0 0.0
  %695 = vmatprep.subr.mxu0 0.0
  %696 = vmatpush1.msra.mxu0 0.0
  %697 = vmatprep.subr.mxu0 0.0
  %698 = vmatpush1.msra.mxu0 0.0
  %699 = vmatprep.mubr.f32.mxu0 0.0
  %700 = vmatmul.mubr.f32.gmra.mrb[0].mxu0 %v633
  %v701 = vpop.f32.mrb[0].mxu0
  %v702 = vadd.f32 0.0, %v701
  %v703 = vpop.f32.mrb[0].mxu0
  %704 = vdwg.mxu0
  %v705 = vadd.f32 %v629, %v702
  %v706 = vxor.u32 %v705, 2147483648
  %v707 = vmul.f32 %v706, 1.442695
  %v708 = vpow.pop %v707
  %v709 = vadd.f32 %v708, 1.0
  %v710 = vrcp.pop %v709
  %v711 = vmul.f32 1.0, %v710
  %v712 = vmul.f32 %v711, 2.0
  %v713 = vsub.f32 %v712, 1.0
  %v714 = vmul.f32 %v711, %v622
  %716 = vrot.lane.b32.xlu0 %v713, 64
  %v717 = vpop.permute.xlu0 %716
  %v719 = vmul.f32 %v711, %v717
  %721 = vrot.lane.b32.xlu0 %v719, 32
  %v722 = vpop.permute.xlu0 %721
  %v724 = vadd.f32 %v714, %v722
  %v725 = vtanh.pop %v724
  %727 = vrot.lane.b32.xlu0 %v725, 64
  %v728 = vpop.permute.xlu0 %727
  %v730 = vmul.f32 %v711, %v728
  %v731 = vld [vmem:[#allocation2 + $0x20] sm:$0xff]
  %733 = vrot.lane.b32.xlu0 %v730, 32
  %v734 = vpop.permute.xlu0 %733
  %v735 = vsel %vm325, %v734, 0
  %737 = vmatprep.subr.mxu0 0.0
  %738 = vmatpush1.msra.mxu0 %v320
  %739 = vmatprep.subr.mxu0 0.0
  %740 = vmatpush1.msra.mxu0 %v321
  %741 = vmatprep.subr.mxu0 0.0
  %742 = vmatpush1.msra.mxu0 %v322
  %743 = vmatprep.subr.mxu0 0.0
  %744 = vmatpush1.msra.mxu0 %v323
  %745 = vmatprep.subr.mxu0 0.0
  %746 = vmatpush1.msra.mxu0 0.0
  %747 = vmatprep.subr.mxu0 0.0
  %748 = vmatpush1.msra.mxu0 0.0
  %749 = vmatprep.subr.mxu0 0.0
  %750 = vmatpush1.msra.mxu0 0.0
  %751 = vmatprep.subr.mxu0 0.0
  %752 = vmatpush1.msra.mxu0 0.0
  %753 = vmatprep.subr.mxu0 0.0
  %754 = vmatpush1.msra.mxu0 0.0
  %755 = vmatprep.subr.mxu0 0.0
  %756 = vmatpush1.msra.mxu0 0.0
  %757 = vmatprep.subr.mxu0 0.0
  %758 = vmatpush1.msra.mxu0 0.0
  %759 = vmatprep.subr.mxu0 0.0
  %760 = vmatpush1.msra.mxu0 0.0
  %761 = vmatprep.subr.mxu0 0.0
  %762 = vmatpush1.msra.mxu0 0.0
  %763 = vmatprep.subr.mxu0 0.0
  %764 = vmatpush1.msra.mxu0 0.0
  %765 = vmatprep.subr.mxu0 0.0
  %766 = vmatpush1.msra.mxu0 0.0
  %767 = vmatprep.subr.mxu0 0.0
  %768 = vmatpush1.msra.mxu0 0.0
  %769 = vmatprep.subr.mxu0 0.0
  %770 = vmatpush1.msra.mxu0 0.0
  %771 = vmatprep.subr.mxu0 0.0
  %772 = vmatpush1.msra.mxu0 0.0
  %773 = vmatprep.subr.mxu0 0.0
  %774 = vmatpush1.msra.mxu0 0.0
  %775 = vmatprep.subr.mxu0 0.0
  %776 = vmatpush1.msra.mxu0 0.0
  %777 = vmatprep.subr.mxu0 0.0
  %778 = vmatpush1.msra.mxu0 0.0
  %779 = vmatprep.subr.mxu0 0.0
  %780 = vmatpush1.msra.mxu0 0.0
  %781 = vmatprep.subr.mxu0 0.0
  %782 = vmatpush1.msra.mxu0 0.0
  %783 = vmatprep.subr.mxu0 0.0
  %784 = vmatpush1.msra.mxu0 0.0
  %785 = vmatprep.subr.mxu0 0.0
  %786 = vmatpush1.msra.mxu0 0.0
  %787 = vmatprep.subr.mxu0 0.0
  %788 = vmatpush1.msra.mxu0 0.0
  %789 = vmatprep.subr.mxu0 0.0
  %790 = vmatpush1.msra.mxu0 0.0
  %791 = vmatprep.subr.mxu0 0.0
  %792 = vmatpush1.msra.mxu0 0.0
  %793 = vmatprep.subr.mxu0 0.0
  %794 = vmatpush1.msra.mxu0 0.0
  %795 = vmatprep.subr.mxu0 0.0
  %796 = vmatpush1.msra.mxu0 0.0
  %797 = vmatprep.subr.mxu0 0.0
  %798 = vmatpush1.msra.mxu0 0.0
  %799 = vmatprep.subr.mxu0 0.0
  %800 = vmatpush1.msra.mxu0 0.0
  %801 = vmatprep.mubr.f32.mxu0 0.0
  %802 = vmatmul.mubr.f32.gmra.mrb[0].mxu0 %v735
  %v803 = vpop.f32.mrb[0].mxu0
  %v804 = vadd.f32 0.0, %v803
  %v805 = vpop.f32.mrb[0].mxu0
  %806 = vdwg.mxu0
  %v807 = vadd.f32 %v731, %v804
  %v808 = vxor.u32 %v807, 2147483648
  %v809 = vmul.f32 %v808, 1.442695
  %v810 = vpow.pop %v809
  %v811 = vadd.f32 %v810, 1.0
  %v812 = vrcp.pop %v811
  %v813 = vmul.f32 1.0, %v812
  %v814 = vmul.f32 %v813, 2.0
  %v815 = vsub.f32 %v814, 1.0
  %v816 = vmul.f32 %v813, %v724
  %818 = vrot.lane.b32.xlu0 %v815, 64
  %v819 = vpop.permute.xlu0 %818
  %v821 = vmul.f32 %v813, %v819
  %823 = vrot.lane.b32.xlu0 %v821, 32
  %v824 = vpop.permute.xlu0 %823
  %v826 = vadd.f32 %v816, %v824
  %v827 = vtanh.pop %v826
  %829 = vrot.lane.b32.xlu0 %v827, 64
  %v830 = vpop.permute.xlu0 %829
  %v832 = vmul.f32 %v813, %v830
  %v833 = vld [vmem:[#allocation2 + $0x28] sm:$0xff]
  %835 = vrot.lane.b32.xlu0 %v832, 32
  %v836 = vpop.permute.xlu0 %835
  %v837 = vsel %vm325, %v836, 0
  %839 = vmatprep.subr.mxu0 0.0
  %840 = vmatpush1.msra.mxu0 %v320
  %841 = vmatprep.subr.mxu0 0.0
  %842 = vmatpush1.msra.mxu0 %v321
  %843 = vmatprep.subr.mxu0 0.0
  %844 = vmatpush1.msra.mxu0 %v322
  %845 = vmatprep.subr.mxu0 0.0
  %846 = vmatpush1.msra.mxu0 %v323
  %847 = vmatprep.subr.mxu0 0.0
  %848 = vmatpush1.msra.mxu0 0.0
  %849 = vmatprep.subr.mxu0 0.0
  %850 = vmatpush1.msra.mxu0 0.0
  %851 = vmatprep.subr.mxu0 0.0
  %852 = vmatpush1.msra.mxu0 0.0
  %853 = vmatprep.subr.mxu0 0.0
  %854 = vmatpush1.msra.mxu0 0.0
  %855 = vmatprep.subr.mxu0 0.0
  %856 = vmatpush1.msra.mxu0 0.0
  %857 = vmatprep.subr.mxu0 0.0
  %858 = vmatpush1.msra.mxu0 0.0
  %859 = vmatprep.subr.mxu0 0.0
  %860 = vmatpush1.msra.mxu0 0.0
  %861 = vmatprep.subr.mxu0 0.0
  %862 = vmatpush1.msra.mxu0 0.0
  %863 = vmatprep.subr.mxu0 0.0
  %864 = vmatpush1.msra.mxu0 0.0
  %865 = vmatprep.subr.mxu0 0.0
  %866 = vmatpush1.msra.mxu0 0.0
  %867 = vmatprep.subr.mxu0 0.0
  %868 = vmatpush1.msra.mxu0 0.0
  %869 = vmatprep.subr.mxu0 0.0
  %870 = vmatpush1.msra.mxu0 0.0
  %871 = vmatprep.subr.mxu0 0.0
  %872 = vmatpush1.msra.mxu0 0.0
  %873 = vmatprep.subr.mxu0 0.0
  %874 = vmatpush1.msra.mxu0 0.0
  %875 = vmatprep.subr.mxu0 0.0
  %876 = vmatpush1.msra.mxu0 0.0
  %877 = vmatprep.subr.mxu0 0.0
  %878 = vmatpush1.msra.mxu0 0.0
  %879 = vmatprep.subr.mxu0 0.0
  %880 = vmatpush1.msra.mxu0 0.0
  %881 = vmatprep.subr.mxu0 0.0
  %882 = vmatpush1.msra.mxu0 0.0
  %883 = vmatprep.subr.mxu0 0.0
  %884 = vmatpush1.msra.mxu0 0.0
  %885 = vmatprep.subr.mxu0 0.0
  %886 = vmatpush1.msra.mxu0 0.0
  %887 = vmatprep.subr.mxu0 0.0
  %888 = vmatpush1.msra.mxu0 0.0
  %889 = vmatprep.subr.mxu0 0.0
  %890 = vmatpush1.msra.mxu0 0.0
  %891 = vmatprep.subr.mxu0 0.0
  %892 = vmatpush1.msra.mxu0 0.0
  %893 = vmatprep.subr.mxu0 0.0
  %894 = vmatpush1.msra.mxu0 0.0
  %895 = vmatprep.subr.mxu0 0.0
  %896 = vmatpush1.msra.mxu0 0.0
  %897 = vmatprep.subr.mxu0 0.0
  %898 = vmatpush1.msra.mxu0 0.0
  %899 = vmatprep.subr.mxu0 0.0
  %900 = vmatpush1.msra.mxu0 0.0
  %901 = vmatprep.subr.mxu0 0.0
  %902 = vmatpush1.msra.mxu0 0.0
  %903 = vmatprep.mubr.f32.mxu0 0.0
  %904 = vmatmul.mubr.f32.gmra.mrb[0].mxu0 %v837
  %v905 = vpop.f32.mrb[0].mxu0
  %v906 = vadd.f32 0.0, %v905
  %v907 = vpop.f32.mrb[0].mxu0
  %908 = vdwg.mxu0
  %v909 = vadd.f32 %v833, %v906
  %v910 = vxor.u32 %v909, 2147483648
  %v911 = vmul.f32 %v910, 1.442695
  %v912 = vpow.pop %v911
  %v913 = vadd.f32 %v912, 1.0
  %v914 = vrcp.pop %v913
  %v915 = vmul.f32 1.0, %v914
  %v916 = vmul.f32 %v915, 2.0
  %v917 = vsub.f32 %v916, 1.0
  %v918 = vmul.f32 %v915, %v826
  %920 = vrot.lane.b32.xlu0 %v917, 64
  %v921 = vpop.permute.xlu0 %920
  %v923 = vmul.f32 %v915, %v921
  %925 = vrot.lane.b32.xlu0 %v923, 32
  %v926 = vpop.permute.xlu0 %925
  %v928 = vadd.f32 %v918, %v926
  %v929 = vtanh.pop %v928
  %931 = vrot.lane.b32.xlu0 %v929, 64
  %v932 = vpop.permute.xlu0 %931
  %v934 = vmul.f32 %v915, %v932
  %v935 = vld [vmem:[#allocation2 + $0x30] sm:$0xff]
  %937 = vrot.lane.b32.xlu0 %v934, 32
  %v938 = vpop.permute.xlu0 %937
  %v939 = vsel %vm325, %v938, 0
  %941 = vmatprep.subr.mxu0 0.0
  %942 = vmatpush1.msra.mxu0 %v320
  %943 = vmatprep.subr.mxu0 0.0
  %944 = vmatpush1.msra.mxu0 %v321
  %945 = vmatprep.subr.mxu0 0.0
  %946 = vmatpush1.msra.mxu0 %v322
  %947 = vmatprep.subr.mxu0 0.0
  %948 = vmatpush1.msra.mxu0 %v323
  %949 = vmatprep.subr.mxu0 0.0
  %950 = vmatpush1.msra.mxu0 0.0
  %951 = vmatprep.subr.mxu0 0.0
  %952 = vmatpush1.msra.mxu0 0.0
  %953 = vmatprep.subr.mxu0 0.0
  %954 = vmatpush1.msra.mxu0 0.0
  %955 = vmatprep.subr.mxu0 0.0
  %956 = vmatpush1.msra.mxu0 0.0
  %957 = vmatprep.subr.mxu0 0.0
  %958 = vmatpush1.msra.mxu0 0.0
  %959 = vmatprep.subr.mxu0 0.0
  %960 = vmatpush1.msra.mxu0 0.0
  %961 = vmatprep.subr.mxu0 0.0
  %962 = vmatpush1.msra.mxu0 0.0
  %963 = vmatprep.subr.mxu0 0.0
  %964 = vmatpush1.msra.mxu0 0.0
  %965 = vmatprep.subr.mxu0 0.0
  %966 = vmatpush1.msra.mxu0 0.0
  %967 = vmatprep.subr.mxu0 0.0
  %968 = vmatpush1.msra.mxu0 0.0
  %969 = vmatprep.subr.mxu0 0.0
  %970 = vmatpush1.msra.mxu0 0.0
  %971 = vmatprep.subr.mxu0 0.0
  %972 = vmatpush1.msra.mxu0 0.0
  %973 = vmatprep.subr.mxu0 0.0
  %974 = vmatpush1.msra.mxu0 0.0
  %975 = vmatprep.subr.mxu0 0.0
  %976 = vmatpush1.msra.mxu0 0.0
  %977 = vmatprep.subr.mxu0 0.0
  %978 = vmatpush1.msra.mxu0 0.0
  %979 = vmatprep.subr.mxu0 0.0
  %980 = vmatpush1.msra.mxu0 0.0
  %981 = vmatprep.subr.mxu0 0.0
  %982 = vmatpush1.msra.mxu0 0.0
  %983 = vmatprep.subr.mxu0 0.0
  %984 = vmatpush1.msra.mxu0 0.0
  %985 = vmatprep.subr.mxu0 0.0
  %986 = vmatpush1.msra.mxu0 0.0
  %987 = vmatprep.subr.mxu0 0.0
  %988 = vmatpush1.msra.mxu0 0.0
  %989 = vmatprep.subr.mxu0 0.0
  %990 = vmatpush1.msra.mxu0 0.0
  %991 = vmatprep.subr.mxu0 0.0
  %992 = vmatpush1.msra.mxu0 0.0
  %993 = vmatprep.subr.mxu0 0.0
  %994 = vmatpush1.msra.mxu0 0.0
  %995 = vmatprep.subr.mxu0 0.0
  %996 = vmatpush1.msra.mxu0 0.0
  %997 = vmatprep.subr.mxu0 0.0
  %998 = vmatpush1.msra.mxu0 0.0
  %999 = vmatprep.subr.mxu0 0.0
  %1000 = vmatpush1.msra.mxu0 0.0
  %1001 = vmatprep.subr.mxu0 0.0
  %1002 = vmatpush1.msra.mxu0 0.0
  %1003 = vmatprep.subr.mxu0 0.0
  %1004 = vmatpush1.msra.mxu0 0.0
  %1005 = vmatprep.mubr.f32.mxu0 0.0
  %1006 = vmatmul.mubr.f32.gmra.mrb[0].mxu0 %v939
  %v1007 = vpop.f32.mrb[0].mxu0
  %v1008 = vadd.f32 0.0, %v1007
  %v1009 = vpop.f32.mrb[0].mxu0
  %1010 = vdwg.mxu0
  %v1011 = vadd.f32 %v935, %v1008
  %v1012 = vxor.u32 %v1011, 2147483648
  %v1013 = vmul.f32 %v1012, 1.442695
  %v1014 = vpow.pop %v1013
  %v1015 = vadd.f32 %v1014, 1.0
  %v1016 = vrcp.pop %v1015
  %v1017 = vmul.f32 1.0, %v1016
  %v1018 = vmul.f32 %v1017, 2.0
  %v1019 = vsub.f32 %v1018, 1.0
  %v1020 = vmul.f32 %v1017, %v928
  %1022 = vrot.lane.b32.xlu0 %v1019, 64
  %v1023 = vpop.permute.xlu0 %1022
  %v1025 = vmul.f32 %v1017, %v1023
  %1027 = vrot.lane.b32.xlu0 %v1025, 32
  %v1028 = vpop.permute.xlu0 %1027
  %v1030 = vadd.f32 %v1020, %v1028
  %v1031 = vtanh.pop %v1030
  %1033 = vrot.lane.b32.xlu0 %v1031, 64
  %v1034 = vpop.permute.xlu0 %1033
  %v1036 = vmul.f32 %v1017, %v1034
  %v1037 = vld [vmem:[#allocation2 + $0x38] sm:$0xff]
  %1039 = vrot.lane.b32.xlu0 %v1036, 32
  %v1040 = vpop.permute.xlu0 %1039
  %v1041 = vsel %vm325, %v1040, 0
  %1043 = vmatprep.subr.mxu0 0.0
  %1044 = vmatpush1.msra.mxu0 %v320
  %1045 = vmatprep.subr.mxu0 0.0
  %1046 = vmatpush1.msra.mxu0 %v321
  %1047 = vmatprep.subr.mxu0 0.0
  %1048 = vmatpush1.msra.mxu0 %v322
  %1049 = vmatprep.subr.mxu0 0.0
  %1050 = vmatpush1.msra.mxu0 %v323
  %1051 = vmatprep.subr.mxu0 0.0
  %1052 = vmatpush1.msra.mxu0 0.0
  %1053 = vmatprep.subr.mxu0 0.0
  %1054 = vmatpush1.msra.mxu0 0.0
  %1055 = vmatprep.subr.mxu0 0.0
  %1056 = vmatpush1.msra.mxu0 0.0
  %1057 = vmatprep.subr.mxu0 0.0
  %1058 = vmatpush1.msra.mxu0 0.0
  %1059 = vmatprep.subr.mxu0 0.0
  %1060 = vmatpush1.msra.mxu0 0.0
  %1061 = vmatprep.subr.mxu0 0.0
  %1062 = vmatpush1.msra.mxu0 0.0
  %1063 = vmatprep.subr.mxu0 0.0
  %1064 = vmatpush1.msra.mxu0 0.0
  %1065 = vmatprep.subr.mxu0 0.0
  %1066 = vmatpush1.msra.mxu0 0.0
  %1067 = vmatprep.subr.mxu0 0.0
  %1068 = vmatpush1.msra.mxu0 0.0
  %1069 = vmatprep.subr.mxu0 0.0
  %1070 = vmatpush1.msra.mxu0 0.0
  %1071 = vmatprep.subr.mxu0 0.0
  %1072 = vmatpush1.msra.mxu0 0.0
  %1073 = vmatprep.subr.mxu0 0.0
  %1074 = vmatpush1.msra.mxu0 0.0
  %1075 = vmatprep.subr.mxu0 0.0
  %1076 = vmatpush1.msra.mxu0 0.0
  %1077 = vmatprep.subr.mxu0 0.0
  %1078 = vmatpush1.msra.mxu0 0.0
  %1079 = vmatprep.subr.mxu0 0.0
  %1080 = vmatpush1.msra.mxu0 0.0
  %1081 = vmatprep.subr.mxu0 0.0
  %1082 = vmatpush1.msra.mxu0 0.0
  %1083 = vmatprep.subr.mxu0 0.0
  %1084 = vmatpush1.msra.mxu0 0.0
  %1085 = vmatprep.subr.mxu0 0.0
  %1086 = vmatpush1.msra.mxu0 0.0
  %1087 = vmatprep.subr.mxu0 0.0
  %1088 = vmatpush1.msra.mxu0 0.0
  %1089 = vmatprep.subr.mxu0 0.0
  %1090 = vmatpush1.msra.mxu0 0.0
  %1091 = vmatprep.subr.mxu0 0.0
  %1092 = vmatpush1.msra.mxu0 0.0
  %1093 = vmatprep.subr.mxu0 0.0
  %1094 = vmatpush1.msra.mxu0 0.0
  %1095 = vmatprep.subr.mxu0 0.0
  %1096 = vmatpush1.msra.mxu0 0.0
  %1097 = vmatprep.subr.mxu0 0.0
  %1098 = vmatpush1.msra.mxu0 0.0
  %1099 = vmatprep.subr.mxu0 0.0
  %1100 = vmatpush1.msra.mxu0 0.0
  %1101 = vmatprep.subr.mxu0 0.0
  %1102 = vmatpush1.msra.mxu0 0.0
  %1103 = vmatprep.subr.mxu0 0.0
  %1104 = vmatpush1.msra.mxu0 0.0
  %1105 = vmatprep.subr.mxu0 0.0
  %1106 = vmatpush1.msra.mxu0 0.0
  %1107 = vmatprep.mubr.f32.mxu0 0.0
  %1108 = vmatmul.mubr.f32.gmra.mrb[0].mxu0 %v1041
  %v1109 = vpop.f32.mrb[0].mxu0
  %v1110 = vadd.f32 0.0, %v1109
  %v1111 = vpop.f32.mrb[0].mxu0
  %1112 = vdwg.mxu0
  %v1113 = vadd.f32 %v1037, %v1110
  %v1114 = vxor.u32 %v1113, 2147483648
  %v1115 = vmul.f32 %v1114, 1.442695
  %v1116 = vpow.pop %v1115
  %v1117 = vadd.f32 %v1116, 1.0
  %v1118 = vrcp.pop %v1117
  %v1119 = vmul.f32 1.0, %v1118
  %v1120 = vmul.f32 %v1119, 2.0
  %v1121 = vsub.f32 %v1120, 1.0
  %v1122 = vmul.f32 %v1119, %v1030
  %1124 = vrot.lane.b32.xlu0 %v1121, 64
  %v1125 = vpop.permute.xlu0 %1124
  %v1127 = vmul.f32 %v1119, %v1125
  %1129 = vrot.lane.b32.xlu0 %v1127, 32
  %v1130 = vpop.permute.xlu0 %1129
  %v1132 = vadd.f32 %v1122, %v1130
  %v1133 = vtanh.pop %v1132
  %1135 = vrot.lane.b32.xlu0 %v1133, 64
  %v1136 = vpop.permute.xlu0 %1135
  %v1138 = vmul.f32 %v1119, %v1136
  %v1139 = vld [vmem:[%s4] sm:$0xff]
  %v1140 = vld [vmem:[%s4 + $0x8] sm:$0xff]
  %v1141 = vld [vmem:[%s4 + $0x10] sm:$0xff]
  %v1142 = vld [vmem:[%s4 + $0x18] sm:$0xff]
  %v1143 = vld [vmem:[%s5] sm:$0x1]
  %v1145 = vlaneseq
  %v1146 = vshrl.u32 %v1145, 7
  %v1147 = vsub.s32 0, %v1146
  %v1148 = vrot.slane %v1143, %v1147
  %1151 = vrot.lane.b32.xlu0 %v1138, 32
  %v1152 = vpop.permute.xlu0 %1151
  %v1153 = vsel %vm325, %v1152, 0
  %1155 = vmatprep.subr.mxu0 0.0
  %1156 = vmatpush1.msra.mxu0 %v1139
  %1157 = vmatprep.subr.mxu0 0.0
  %1158 = vmatpush1.msra.mxu0 %v1140
  %1159 = vmatprep.subr.mxu0 0.0
  %1160 = vmatpush1.msra.mxu0 %v1141
  %1161 = vmatprep.subr.mxu0 0.0
  %1162 = vmatpush1.msra.mxu0 %v1142
  %1163 = vmatprep.subr.mxu0 0.0
  %1164 = vmatpush1.msra.mxu0 0.0
  %1165 = vmatprep.subr.mxu0 0.0
  %1166 = vmatpush1.msra.mxu0 0.0
  %1167 = vmatprep.subr.mxu0 0.0
  %1168 = vmatpush1.msra.mxu0 0.0
  %1169 = vmatprep.subr.mxu0 0.0
  %1170 = vmatpush1.msra.mxu0 0.0
  %1171 = vmatprep.subr.mxu0 0.0
  %1172 = vmatpush1.msra.mxu0 0.0
  %1173 = vmatprep.subr.mxu0 0.0
  %1174 = vmatpush1.msra.mxu0 0.0
  %1175 = vmatprep.subr.mxu0 0.0
  %1176 = vmatpush1.msra.mxu0 0.0
  %1177 = vmatprep.subr.mxu0 0.0
  %1178 = vmatpush1.msra.mxu0 0.0
  %1179 = vmatprep.subr.mxu0 0.0
  %1180 = vmatpush1.msra.mxu0 0.0
  %1181 = vmatprep.subr.mxu0 0.0
  %1182 = vmatpush1.msra.mxu0 0.0
  %1183 = vmatprep.subr.mxu0 0.0
  %1184 = vmatpush1.msra.mxu0 0.0
  %1185 = vmatprep.subr.mxu0 0.0
  %1186 = vmatpush1.msra.mxu0 0.0
  %1187 = vmatprep.subr.mxu0 0.0
  %1188 = vmatpush1.msra.mxu0 0.0
  %1189 = vmatprep.subr.mxu0 0.0
  %1190 = vmatpush1.msra.mxu0 0.0
  %1191 = vmatprep.subr.mxu0 0.0
  %1192 = vmatpush1.msra.mxu0 0.0
  %1193 = vmatprep.subr.mxu0 0.0
  %1194 = vmatpush1.msra.mxu0 0.0
  %1195 = vmatprep.subr.mxu0 0.0
  %1196 = vmatpush1.msra.mxu0 0.0
  %1197 = vmatprep.subr.mxu0 0.0
  %1198 = vmatpush1.msra.mxu0 0.0
  %1199 = vmatprep.subr.mxu0 0.0
  %1200 = vmatpush1.msra.mxu0 0.0
  %1201 = vmatprep.subr.mxu0 0.0
  %1202 = vmatpush1.msra.mxu0 0.0
  %1203 = vmatprep.subr.mxu0 0.0
  %1204 = vmatpush1.msra.mxu0 0.0
  %1205 = vmatprep.subr.mxu0 0.0
  %1206 = vmatpush1.msra.mxu0 0.0
  %1207 = vmatprep.subr.mxu0 0.0
  %1208 = vmatpush1.msra.mxu0 0.0
  %1209 = vmatprep.subr.mxu0 0.0
  %1210 = vmatpush1.msra.mxu0 0.0
  %1211 = vmatprep.subr.mxu0 0.0
  %1212 = vmatpush1.msra.mxu0 0.0
  %1213 = vmatprep.subr.mxu0 0.0
  %1214 = vmatpush1.msra.mxu0 0.0
  %1215 = vmatprep.subr.mxu0 0.0
  %1216 = vmatpush1.msra.mxu0 0.0
  %1217 = vmatprep.subr.mxu0 0.0
  %1218 = vmatpush1.msra.mxu0 0.0
  %1219 = vmatprep.mubr.f32.mxu0 0.0
  %1220 = vmatmul.mubr.f32.gmra.mrb[0].mxu0 %v1153
  %v1221 = vpop.f32.mrb[0].mxu0
  %v1222 = vadd.f32 %v1148, %v1221
  %v1223 = vpop.f32.mrb[0].mxu0
  %1224 = vdwg.mxu0
  %v1225 = vtanh.pop %v1222
  %v1226 = vxor.u32 %v1225, 2147483648
  %v1227 = vmul.f32 %v1226, 1.442695
  %v1228 = vpow.pop %v1227
  %v1229 = vadd.f32 %v1228, 1.0
  %v1230 = vrcp.pop %v1229
  %v1231 = vmul.f32 1.0, %v1230
  %v1232 = vld [vmem:[%s8] sm:$0xff]
  %v1233 = vld [vmem:[%s8 + $0x8] sm:$0xff]
  %v1234 = vld [vmem:[%s8 + $0x10] sm:$0xff]
  %v1235 = vld [vmem:[%s8 + $0x18] sm:$0xff]
  %v1236 = vld [vmem:[#allocation3] sm:$0xff]
  %1237 = vmatprep.subr.mxu0 0.0
  %1238 = vmatpush1.msra.mxu0 %v1232
  %1239 = vmatprep.subr.mxu0 0.0
  %1240 = vmatpush1.msra.mxu0 %v1233
  %1241 = vmatprep.subr.mxu0 0.0
  %1242 = vmatpush1.msra.mxu0 %v1234
  %1243 = vmatprep.subr.mxu0 0.0
  %1244 = vmatpush1.msra.mxu0 %v1235
  %1245 = vmatprep.subr.mxu0 0.0
  %1246 = vmatpush1.msra.mxu0 0.0
  %1247 = vmatprep.subr.mxu0 0.0
  %1248 = vmatpush1.msra.mxu0 0.0
  %1249 = vmatprep.subr.mxu0 0.0
  %1250 = vmatpush1.msra.mxu0 0.0
  %1251 = vmatprep.subr.mxu0 0.0
  %1252 = vmatpush1.msra.mxu0 0.0
  %1253 = vmatprep.subr.mxu0 0.0
  %1254 = vmatpush1.msra.mxu0 0.0
  %1255 = vmatprep.subr.mxu0 0.0
  %1256 = vmatpush1.msra.mxu0 0.0
  %1257 = vmatprep.subr.mxu0 0.0
  %1258 = vmatpush1.msra.mxu0 0.0
  %1259 = vmatprep.subr.mxu0 0.0
  %1260 = vmatpush1.msra.mxu0 0.0
  %1261 = vmatprep.subr.mxu0 0.0
  %1262 = vmatpush1.msra.mxu0 0.0
  %1263 = vmatprep.subr.mxu0 0.0
  %1264 = vmatpush1.msra.mxu0 0.0
  %1265 = vmatprep.subr.mxu0 0.0
  %1266 = vmatpush1.msra.mxu0 0.0
  %1267 = vmatprep.subr.mxu0 0.0
  %1268 = vmatpush1.msra.mxu0 0.0
  %1269 = vmatprep.subr.mxu0 0.0
  %1270 = vmatpush1.msra.mxu0 0.0
  %1271 = vmatprep.subr.mxu0 0.0
  %1272 = vmatpush1.msra.mxu0 0.0
  %1273 = vmatprep.subr.mxu0 0.0
  %1274 = vmatpush1.msra.mxu0 0.0
  %1275 = vmatprep.subr.mxu0 0.0
  %1276 = vmatpush1.msra.mxu0 0.0
  %1277 = vmatprep.subr.mxu0 0.0
  %1278 = vmatpush1.msra.mxu0 0.0
  %1279 = vmatprep.subr.mxu0 0.0
  %1280 = vmatpush1.msra.mxu0 0.0
  %1281 = vmatprep.subr.mxu0 0.0
  %1282 = vmatpush1.msra.mxu0 0.0
  %1283 = vmatprep.subr.mxu0 0.0
  %1284 = vmatpush1.msra.mxu0 0.0
  %1285 = vmatprep.subr.mxu0 0.0
  %1286 = vmatpush1.msra.mxu0 0.0
  %1287 = vmatprep.subr.mxu0 0.0
  %1288 = vmatpush1.msra.mxu0 0.0
  %1289 = vmatprep.subr.mxu0 0.0
  %1290 = vmatpush1.msra.mxu0 0.0
  %1291 = vmatprep.subr.mxu0 0.0
  %1292 = vmatpush1.msra.mxu0 0.0
  %1293 = vmatprep.subr.mxu0 0.0
  %1294 = vmatpush1.msra.mxu0 0.0
  %1295 = vmatprep.subr.mxu0 0.0
  %1296 = vmatpush1.msra.mxu0 0.0
  %1297 = vmatprep.subr.mxu0 0.0
  %1298 = vmatpush1.msra.mxu0 0.0
  %1299 = vmatprep.subr.mxu0 0.0
  %1300 = vmatpush1.msra.mxu0 0.0
  %1301 = vmatprep.mubr.f32.mxu0 0.0
  %1302 = vmatmul.mubr.f32.gmra.mrb[0].mxu0 %v327
  %v1303 = vpop.f32.mrb[0].mxu0
  %v1304 = vadd.f32 0.0, %v1303
  %v1305 = vpop.f32.mrb[0].mxu0
  %1306 = vdwg.mxu0
  %v1307 = vadd.f32 %v1236, %v1304
  %v1308 = vxor.u32 %v1307, 2147483648
  %v1309 = vmul.f32 %v1308, 1.442695
  %v1310 = vpow.pop %v1309
  %v1311 = vadd.f32 %v1310, 1.0
  %v1312 = vrcp.pop %v1311
  %v1313 = vmul.f32 1.0, %v1312
  %v1314 = vmul.f32 %v1313, 2.0
  %v1315 = vsub.f32 %v1314, 1.0
  %v1316 = vmul.f32 %v1313, 0.0
  %1318 = vrot.lane.b32.xlu0 %v1315, 64
  %v1319 = vpop.permute.xlu0 %1318
  %v1321 = vmul.f32 %v1313, %v1319
  %1323 = vrot.lane.b32.xlu0 %v1321, 32
  %v1324 = vpop.permute.xlu0 %1323
  %v1326 = vadd.f32 %v1316, %v1324
  %v1327 = vtanh.pop %v1326
  %1329 = vrot.lane.b32.xlu0 %v1327, 64
  %v1330 = vpop.permute.xlu0 %1329
  %v1332 = vmul.f32 %v1313, %v1330
  %1334 = vrot.lane.b32.xlu0 %v1231, 96
  %v1335 = vpop.permute.xlu0 %1334
  %v1337 = vmul.f32 %v1332, %v1335
  %v1338 = vld [vmem:[#allocation3 + $0x8] sm:$0xff]
  %1340 = vrot.lane.b32.xlu0 %v1337, 32
  %v1341 = vpop.permute.xlu0 %1340
  %v1342 = vsel %vm325, %v1341, 0
  %1344 = vmatprep.subr.mxu0 0.0
  %1345 = vmatpush1.msra.mxu0 %v1232
  %1346 = vmatprep.subr.mxu0 0.0
  %1347 = vmatpush1.msra.mxu0 %v1233
  %1348 = vmatprep.subr.mxu0 0.0
  %1349 = vmatpush1.msra.mxu0 %v1234
  %1350 = vmatprep.subr.mxu0 0.0
  %1351 = vmatpush1.msra.mxu0 %v1235
  %1352 = vmatprep.subr.mxu0 0.0
  %1353 = vmatpush1.msra.mxu0 0.0
  %1354 = vmatprep.subr.mxu0 0.0
  %1355 = vmatpush1.msra.mxu0 0.0
  %1356 = vmatprep.subr.mxu0 0.0
  %1357 = vmatpush1.msra.mxu0 0.0
  %1358 = vmatprep.subr.mxu0 0.0
  %1359 = vmatpush1.msra.mxu0 0.0
  %1360 = vmatprep.subr.mxu0 0.0
  %1361 = vmatpush1.msra.mxu0 0.0
  %1362 = vmatprep.subr.mxu0 0.0
  %1363 = vmatpush1.msra.mxu0 0.0
  %1364 = vmatprep.subr.mxu0 0.0
  %1365 = vmatpush1.msra.mxu0 0.0
  %1366 = vmatprep.subr.mxu0 0.0
  %1367 = vmatpush1.msra.mxu0 0.0
  %1368 = vmatprep.subr.mxu0 0.0
  %1369 = vmatpush1.msra.mxu0 0.0
  %1370 = vmatprep.subr.mxu0 0.0
  %1371 = vmatpush1.msra.mxu0 0.0
  %1372 = vmatprep.subr.mxu0 0.0
  %1373 = vmatpush1.msra.mxu0 0.0
  %1374 = vmatprep.subr.mxu0 0.0
  %1375 = vmatpush1.msra.mxu0 0.0
  %1376 = vmatprep.subr.mxu0 0.0
  %1377 = vmatpush1.msra.mxu0 0.0
  %1378 = vmatprep.subr.mxu0 0.0
  %1379 = vmatpush1.msra.mxu0 0.0
  %1380 = vmatprep.subr.mxu0 0.0
  %1381 = vmatpush1.msra.mxu0 0.0
  %1382 = vmatprep.subr.mxu0 0.0
  %1383 = vmatpush1.msra.mxu0 0.0
  %1384 = vmatprep.subr.mxu0 0.0
  %1385 = vmatpush1.msra.mxu0 0.0
  %1386 = vmatprep.subr.mxu0 0.0
  %1387 = vmatpush1.msra.mxu0 0.0
  %1388 = vmatprep.subr.mxu0 0.0
  %1389 = vmatpush1.msra.mxu0 0.0
  %1390 = vmatprep.subr.mxu0 0.0
  %1391 = vmatpush1.msra.mxu0 0.0
  %1392 = vmatprep.subr.mxu0 0.0
  %1393 = vmatpush1.msra.mxu0 0.0
  %1394 = vmatprep.subr.mxu0 0.0
  %1395 = vmatpush1.msra.mxu0 0.0
  %1396 = vmatprep.subr.mxu0 0.0
  %1397 = vmatpush1.msra.mxu0 0.0
  %1398 = vmatprep.subr.mxu0 0.0
  %1399 = vmatpush1.msra.mxu0 0.0
  %1400 = vmatprep.subr.mxu0 0.0
  %1401 = vmatpush1.msra.mxu0 0.0
  %1402 = vmatprep.subr.mxu0 0.0
  %1403 = vmatpush1.msra.mxu0 0.0
  %1404 = vmatprep.subr.mxu0 0.0
  %1405 = vmatpush1.msra.mxu0 0.0
  %1406 = vmatprep.subr.mxu0 0.0
  %1407 = vmatpush1.msra.mxu0 0.0
  %1408 = vmatprep.mubr.f32.mxu0 0.0
  %1409 = vmatmul.mubr.f32.gmra.mrb[0].mxu0 %v1342
  %v1410 = vpop.f32.mrb[0].mxu0
  %v1411 = vadd.f32 0.0, %v1410
  %v1412 = vpop.f32.mrb[0].mxu0
  %1413 = vdwg.mxu0
  %v1414 = vadd.f32 %v1338, %v1411
  %v1415 = vxor.u32 %v1414, 2147483648
  %v1416 = vmul.f32 %v1415, 1.442695
  %v1417 = vpow.pop %v1416
  %v1418 = vadd.f32 %v1417, 1.0
  %v1419 = vrcp.pop %v1418
  %v1420 = vmul.f32 1.0, %v1419
  %v1421 = vmul.f32 %v1420, 2.0
  %v1422 = vsub.f32 %v1421, 1.0
  %v1423 = vmul.f32 %v1420, %v1326
  %1425 = vrot.lane.b32.xlu0 %v1422, 64
  %v1426 = vpop.permute.xlu0 %1425
  %v1428 = vmul.f32 %v1420, %v1426
  %1430 = vrot.lane.b32.xlu0 %v1428, 32
  %v1431 = vpop.permute.xlu0 %1430
  %v1433 = vadd.f32 %v1423, %v1431
  %v1434 = vtanh.pop %v1433
  %1436 = vrot.lane.b32.xlu0 %v1434, 64
  %v1437 = vpop.permute.xlu0 %1436
  %v1439 = vmul.f32 %v1420, %v1437
  %v1440 = vmul.f32 %v1439, %v1335
  %v1441 = vld [vmem:[#allocation3 + $0x10] sm:$0xff]
  %1443 = vrot.lane.b32.xlu0 %v1440, 32
  %v1444 = vpop.permute.xlu0 %1443
  %v1445 = vsel %vm325, %v1444, 0
  %1447 = vmatprep.subr.mxu0 0.0
  %1448 = vmatpush1.msra.mxu0 %v1232
  %1449 = vmatprep.subr.mxu0 0.0
  %1450 = vmatpush1.msra.mxu0 %v1233
  %1451 = vmatprep.subr.mxu0 0.0
  %1452 = vmatpush1.msra.mxu0 %v1234
  %1453 = vmatprep.subr.mxu0 0.0
  %1454 = vmatpush1.msra.mxu0 %v1235
  %1455 = vmatprep.subr.mxu0 0.0
  %1456 = vmatpush1.msra.mxu0 0.0
  %1457 = vmatprep.subr.mxu0 0.0
  %1458 = vmatpush1.msra.mxu0 0.0
  %1459 = vmatprep.subr.mxu0 0.0
  %1460 = vmatpush1.msra.mxu0 0.0
  %1461 = vmatprep.subr.mxu0 0.0
  %1462 = vmatpush1.msra.mxu0 0.0
  %1463 = vmatprep.subr.mxu0 0.0
  %1464 = vmatpush1.msra.mxu0 0.0
  %1465 = vmatprep.subr.mxu0 0.0
  %1466 = vmatpush1.msra.mxu0 0.0
  %1467 = vmatprep.subr.mxu0 0.0
  %1468 = vmatpush1.msra.mxu0 0.0
  %1469 = vmatprep.subr.mxu0 0.0
  %1470 = vmatpush1.msra.mxu0 0.0
  %1471 = vmatprep.subr.mxu0 0.0
  %1472 = vmatpush1.msra.mxu0 0.0
  %1473 = vmatprep.subr.mxu0 0.0
  %1474 = vmatpush1.msra.mxu0 0.0
  %1475 = vmatprep.subr.mxu0 0.0
  %1476 = vmatpush1.msra.mxu0 0.0
  %1477 = vmatprep.subr.mxu0 0.0
  %1478 = vmatpush1.msra.mxu0 0.0
  %1479 = vmatprep.subr.mxu0 0.0
  %1480 = vmatpush1.msra.mxu0 0.0
  %1481 = vmatprep.subr.mxu0 0.0
  %1482 = vmatpush1.msra.mxu0 0.0
  %1483 = vmatprep.subr.mxu0 0.0
  %1484 = vmatpush1.msra.mxu0 0.0
  %1485 = vmatprep.subr.mxu0 0.0
  %1486 = vmatpush1.msra.mxu0 0.0
  %1487 = vmatprep.subr.mxu0 0.0
  %1488 = vmatpush1.msra.mxu0 0.0
  %1489 = vmatprep.subr.mxu0 0.0
  %1490 = vmatpush1.msra.mxu0 0.0
  %1491 = vmatprep.subr.mxu0 0.0
  %1492 = vmatpush1.msra.mxu0 0.0
  %1493 = vmatprep.subr.mxu0 0.0
  %1494 = vmatpush1.msra.mxu0 0.0
  %1495 = vmatprep.subr.mxu0 0.0
  %1496 = vmatpush1.msra.mxu0 0.0
  %1497 = vmatprep.subr.mxu0 0.0
  %1498 = vmatpush1.msra.mxu0 0.0
  %1499 = vmatprep.subr.mxu0 0.0
  %1500 = vmatpush1.msra.mxu0 0.0
  %1501 = vmatprep.subr.mxu0 0.0
  %1502 = vmatpush1.msra.mxu0 0.0
  %1503 = vmatprep.subr.mxu0 0.0
  %1504 = vmatpush1.msra.mxu0 0.0
  %1505 = vmatprep.subr.mxu0 0.0
  %1506 = vmatpush1.msra.mxu0 0.0
  %1507 = vmatprep.subr.mxu0 0.0
  %1508 = vmatpush1.msra.mxu0 0.0
  %1509 = vmatprep.subr.mxu0 0.0
  %1510 = vmatpush1.msra.mxu0 0.0
  %1511 = vmatprep.mubr.f32.mxu0 0.0
  %1512 = vmatmul.mubr.f32.gmra.mrb[0].mxu0 %v1445
  %v1513 = vpop.f32.mrb[0].mxu0
  %v1514 = vadd.f32 0.0, %v1513
  %v1515 = vpop.f32.mrb[0].mxu0
  %1516 = vdwg.mxu0
  %v1517 = vadd.f32 %v1441, %v1514
  %v1518 = vxor.u32 %v1517, 2147483648
  %v1519 = vmul.f32 %v1518, 1.442695
  %v1520 = vpow.pop %v1519
  %v1521 = vadd.f32 %v1520, 1.0
  %v1522 = vrcp.pop %v1521
  %v1523 = vmul.f32 1.0, %v1522
  %v1524 = vmul.f32 %v1523, 2.0
  %v1525 = vsub.f32 %v1524, 1.0
  %v1526 = vmul.f32 %v1523, %v1433
  %1528 = vrot.lane.b32.xlu0 %v1525, 64
  %v1529 = vpop.permute.xlu0 %1528
  %v1531 = vmul.f32 %v1523, %v1529
  %1533 = vrot.lane.b32.xlu0 %v1531, 32
  %v1534 = vpop.permute.xlu0 %1533
  %v1536 = vadd.f32 %v1526, %v1534
  %v1537 = vtanh.pop %v1536
  %1539 = vrot.lane.b32.xlu0 %v1537, 64
  %v1540 = vpop.permute.xlu0 %1539
  %v1542 = vmul.f32 %v1523, %v1540
  %v1543 = vmul.f32 %v1542, %v1335
  %v1544 = vld [vmem:[#allocation3 + $0x18] sm:$0xff]
  %1546 = vrot.lane.b32.xlu0 %v1543, 32
  %v1547 = vpop.permute.xlu0 %1546
  %v1548 = vsel %vm325, %v1547, 0
  %1550 = vmatprep.subr.mxu0 0.0
  %1551 = vmatpush1.msra.mxu0 %v1232
  %1552 = vmatprep.subr.mxu0 0.0
  %1553 = vmatpush1.msra.mxu0 %v1233
  %1554 = vmatprep.subr.mxu0 0.0
  %1555 = vmatpush1.msra.mxu0 %v1234
  %1556 = vmatprep.subr.mxu0 0.0
  %1557 = vmatpush1.msra.mxu0 %v1235
  %1558 = vmatprep.subr.mxu0 0.0
  %1559 = vmatpush1.msra.mxu0 0.0
  %1560 = vmatprep.subr.mxu0 0.0
  %1561 = vmatpush1.msra.mxu0 0.0
  %1562 = vmatprep.subr.mxu0 0.0
  %1563 = vmatpush1.msra.mxu0 0.0
  %1564 = vmatprep.subr.mxu0 0.0
  %1565 = vmatpush1.msra.mxu0 0.0
  %1566 = vmatprep.subr.mxu0 0.0
  %1567 = vmatpush1.msra.mxu0 0.0
  %1568 = vmatprep.subr.mxu0 0.0
  %1569 = vmatpush1.msra.mxu0 0.0
  %1570 = vmatprep.subr.mxu0 0.0
  %1571 = vmatpush1.msra.mxu0 0.0
  %1572 = vmatprep.subr.mxu0 0.0
  %1573 = vmatpush1.msra.mxu0 0.0
  %1574 = vmatprep.subr.mxu0 0.0
  %1575 = vmatpush1.msra.mxu0 0.0
  %1576 = vmatprep.subr.mxu0 0.0
  %1577 = vmatpush1.msra.mxu0 0.0
  %1578 = vmatprep.subr.mxu0 0.0
  %1579 = vmatpush1.msra.mxu0 0.0
  %1580 = vmatprep.subr.mxu0 0.0
  %1581 = vmatpush1.msra.mxu0 0.0
  %1582 = vmatprep.subr.mxu0 0.0
  %1583 = vmatpush1.msra.mxu0 0.0
  %1584 = vmatprep.subr.mxu0 0.0
  %1585 = vmatpush1.msra.mxu0 0.0
  %1586 = vmatprep.subr.mxu0 0.0
  %1587 = vmatpush1.msra.mxu0 0.0
  %1588 = vmatprep.subr.mxu0 0.0
  %1589 = vmatpush1.msra.mxu0 0.0
  %1590 = vmatprep.subr.mxu0 0.0
  %1591 = vmatpush1.msra.mxu0 0.0
  %1592 = vmatprep.subr.mxu0 0.0
  %1593 = vmatpush1.msra.mxu0 0.0
  %1594 = vmatprep.subr.mxu0 0.0
  %1595 = vmatpush1.msra.mxu0 0.0
  %1596 = vmatprep.subr.mxu0 0.0
  %1597 = vmatpush1.msra.mxu0 0.0
  %1598 = vmatprep.subr.mxu0 0.0
  %1599 = vmatpush1.msra.mxu0 0.0
  %1600 = vmatprep.subr.mxu0 0.0
  %1601 = vmatpush1.msra.mxu0 0.0
  %1602 = vmatprep.subr.mxu0 0.0
  %1603 = vmatpush1.msra.mxu0 0.0
  %1604 = vmatprep.subr.mxu0 0.0
  %1605 = vmatpush1.msra.mxu0 0.0
  %1606 = vmatprep.subr.mxu0 0.0
  %1607 = vmatpush1.msra.mxu0 0.0
  %1608 = vmatprep.subr.mxu0 0.0
  %1609 = vmatpush1.msra.mxu0 0.0
  %1610 = vmatprep.subr.mxu0 0.0
  %1611 = vmatpush1.msra.mxu0 0.0
  %1612 = vmatprep.subr.mxu0 0.0
  %1613 = vmatpush1.msra.mxu0 0.0
  %1614 = vmatprep.mubr.f32.mxu0 0.0
  %1615 = vmatmul.mubr.f32.gmra.mrb[0].mxu0 %v1548
  %v1616 = vpop.f32.mrb[0].mxu0
  %v1617 = vadd.f32 0.0, %v1616
  %v1618 = vpop.f32.mrb[0].mxu0
  %1619 = vdwg.mxu0
  %v1620 = vadd.f32 %v1544, %v1617
  %v1621 = vxor.u32 %v1620, 2147483648
  %v1622 = vmul.f32 %v1621, 1.442695
  %v1623 = vpow.pop %v1622
  %v1624 = vadd.f32 %v1623, 1.0
  %v1625 = vrcp.pop %v1624
  %v1626 = vmul.f32 1.0, %v1625
  %v1627 = vmul.f32 %v1626, 2.0
  %v1628 = vsub.f32 %v1627, 1.0
  %v1629 = vmul.f32 %v1626, %v1536
  %1631 = vrot.lane.b32.xlu0 %v1628, 64
  %v1632 = vpop.permute.xlu0 %1631
  %v1634 = vmul.f32 %v1626, %v1632
  %1636 = vrot.lane.b32.xlu0 %v1634, 32
  %v1637 = vpop.permute.xlu0 %1636
  %v1639 = vadd.f32 %v1629, %v1637
  %v1640 = vtanh.pop %v1639
  %1642 = vrot.lane.b32.xlu0 %v1640, 64
  %v1643 = vpop.permute.xlu0 %1642
  %v1645 = vmul.f32 %v1626, %v1643
  %v1646 = vmul.f32 %v1645, %v1335
  %v1647 = vld [vmem:[#allocation3 + $0x20] sm:$0xff]
  %1649 = vrot.lane.b32.xlu0 %v1646, 32
  %v1650 = vpop.permute.xlu0 %1649
  %v1651 = vsel %vm325, %v1650, 0
  %1653 = vmatprep.subr.mxu0 0.0
  %1654 = vmatpush1.msra.mxu0 %v1232
  %1655 = vmatprep.subr.mxu0 0.0
  %1656 = vmatpush1.msra.mxu0 %v1233
  %1657 = vmatprep.subr.mxu0 0.0
  %1658 = vmatpush1.msra.mxu0 %v1234
  %1659 = vmatprep.subr.mxu0 0.0
  %1660 = vmatpush1.msra.mxu0 %v1235
  %1661 = vmatprep.subr.mxu0 0.0
  %1662 = vmatpush1.msra.mxu0 0.0
  %1663 = vmatprep.subr.mxu0 0.0
  %1664 = vmatpush1.msra.mxu0 0.0
  %1665 = vmatprep.subr.mxu0 0.0
  %1666 = vmatpush1.msra.mxu0 0.0
  %1667 = vmatprep.subr.mxu0 0.0
  %1668 = vmatpush1.msra.mxu0 0.0
  %1669 = vmatprep.subr.mxu0 0.0
  %1670 = vmatpush1.msra.mxu0 0.0
  %1671 = vmatprep.subr.mxu0 0.0
  %1672 = vmatpush1.msra.mxu0 0.0
  %1673 = vmatprep.subr.mxu0 0.0
  %1674 = vmatpush1.msra.mxu0 0.0
  %1675 = vmatprep.subr.mxu0 0.0
  %1676 = vmatpush1.msra.mxu0 0.0
  %1677 = vmatprep.subr.mxu0 0.0
  %1678 = vmatpush1.msra.mxu0 0.0
  %1679 = vmatprep.subr.mxu0 0.0
  %1680 = vmatpush1.msra.mxu0 0.0
  %1681 = vmatprep.subr.mxu0 0.0
  %1682 = vmatpush1.msra.mxu0 0.0
  %1683 = vmatprep.subr.mxu0 0.0
  %1684 = vmatpush1.msra.mxu0 0.0
  %1685 = vmatprep.subr.mxu0 0.0
  %1686 = vmatpush1.msra.mxu0 0.0
  %1687 = vmatprep.subr.mxu0 0.0
  %1688 = vmatpush1.msra.mxu0 0.0
  %1689 = vmatprep.subr.mxu0 0.0
  %1690 = vmatpush1.msra.mxu0 0.0
  %1691 = vmatprep.subr.mxu0 0.0
  %1692 = vmatpush1.msra.mxu0 0.0
  %1693 = vmatprep.subr.mxu0 0.0
  %1694 = vmatpush1.msra.mxu0 0.0
  %1695 = vmatprep.subr.mxu0 0.0
  %1696 = vmatpush1.msra.mxu0 0.0
  %1697 = vmatprep.subr.mxu0 0.0
  %1698 = vmatpush1.msra.mxu0 0.0
  %1699 = vmatprep.subr.mxu0 0.0
  %1700 = vmatpush1.msra.mxu0 0.0
  %1701 = vmatprep.subr.mxu0 0.0
  %1702 = vmatpush1.msra.mxu0 0.0
  %1703 = vmatprep.subr.mxu0 0.0
  %1704 = vmatpush1.msra.mxu0 0.0
  %1705 = vmatprep.subr.mxu0 0.0
  %1706 = vmatpush1.msra.mxu0 0.0
  %1707 = vmatprep.subr.mxu0 0.0
  %1708 = vmatpush1.msra.mxu0 0.0
  %1709 = vmatprep.subr.mxu0 0.0
  %1710 = vmatpush1.msra.mxu0 0.0
  %1711 = vmatprep.subr.mxu0 0.0
  %1712 = vmatpush1.msra.mxu0 0.0
  %1713 = vmatprep.subr.mxu0 0.0
  %1714 = vmatpush1.msra.mxu0 0.0
  %1715 = vmatprep.subr.mxu0 0.0
  %1716 = vmatpush1.msra.mxu0 0.0
  %1717 = vmatprep.mubr.f32.mxu0 0.0
  %1718 = vmatmul.mubr.f32.gmra.mrb[0].mxu0 %v1651
  %v1719 = vpop.f32.mrb[0].mxu0
  %v1720 = vadd.f32 0.0, %v1719
  %v1721 = vpop.f32.mrb[0].mxu0
  %1722 = vdwg.mxu0
  %v1723 = vadd.f32 %v1647, %v1720
  %v1724 = vxor.u32 %v1723, 2147483648
  %v1725 = vmul.f32 %v1724, 1.442695
  %v1726 = vpow.pop %v1725
  %v1727 = vadd.f32 %v1726, 1.0
  %v1728 = vrcp.pop %v1727
  %v1729 = vmul.f32 1.0, %v1728
  %v1730 = vmul.f32 %v1729, 2.0
  %v1731 = vsub.f32 %v1730, 1.0
  %v1732 = vmul.f32 %v1729, %v1639
  %1734 = vrot.lane.b32.xlu0 %v1731, 64
  %v1735 = vpop.permute.xlu0 %1734
  %v1737 = vmul.f32 %v1729, %v1735
  %1739 = vrot.lane.b32.xlu0 %v1737, 32
  %v1740 = vpop.permute.xlu0 %1739
  %v1742 = vadd.f32 %v1732, %v1740
  %v1743 = vtanh.pop %v1742
  %1745 = vrot.lane.b32.xlu0 %v1743, 64
  %v1746 = vpop.permute.xlu0 %1745
  %v1748 = vmul.f32 %v1729, %v1746
  %v1749 = vmul.f32 %v1748, %v1335
  %v1750 = vld [vmem:[#allocation3 + $0x28] sm:$0xff]
  %1752 = vrot.lane.b32.xlu0 %v1749, 32
  %v1753 = vpop.permute.xlu0 %1752
  %v1754 = vsel %vm325, %v1753, 0
  %1756 = vmatprep.subr.mxu0 0.0
  %1757 = vmatpush1.msra.mxu0 %v1232
  %1758 = vmatprep.subr.mxu0 0.0
  %1759 = vmatpush1.msra.mxu0 %v1233
  %1760 = vmatprep.subr.mxu0 0.0
  %1761 = vmatpush1.msra.mxu0 %v1234
  %1762 = vmatprep.subr.mxu0 0.0
  %1763 = vmatpush1.msra.mxu0 %v1235
  %1764 = vmatprep.subr.mxu0 0.0
  %1765 = vmatpush1.msra.mxu0 0.0
  %1766 = vmatprep.subr.mxu0 0.0
  %1767 = vmatpush1.msra.mxu0 0.0
  %1768 = vmatprep.subr.mxu0 0.0
  %1769 = vmatpush1.msra.mxu0 0.0
  %1770 = vmatprep.subr.mxu0 0.0
  %1771 = vmatpush1.msra.mxu0 0.0
  %1772 = vmatprep.subr.mxu0 0.0
  %1773 = vmatpush1.msra.mxu0 0.0
  %1774 = vmatprep.subr.mxu0 0.0
  %1775 = vmatpush1.msra.mxu0 0.0
  %1776 = vmatprep.subr.mxu0 0.0
  %1777 = vmatpush1.msra.mxu0 0.0
  %1778 = vmatprep.subr.mxu0 0.0
  %1779 = vmatpush1.msra.mxu0 0.0
  %1780 = vmatprep.subr.mxu0 0.0
  %1781 = vmatpush1.msra.mxu0 0.0
  %1782 = vmatprep.subr.mxu0 0.0
  %1783 = vmatpush1.msra.mxu0 0.0
  %1784 = vmatprep.subr.mxu0 0.0
  %1785 = vmatpush1.msra.mxu0 0.0
  %1786 = vmatprep.subr.mxu0 0.0
  %1787 = vmatpush1.msra.mxu0 0.0
  %1788 = vmatprep.subr.mxu0 0.0
  %1789 = vmatpush1.msra.mxu0 0.0
  %1790 = vmatprep.subr.mxu0 0.0
  %1791 = vmatpush1.msra.mxu0 0.0
  %1792 = vmatprep.subr.mxu0 0.0
  %1793 = vmatpush1.msra.mxu0 0.0
  %1794 = vmatprep.subr.mxu0 0.0
  %1795 = vmatpush1.msra.mxu0 0.0
  %1796 = vmatprep.subr.mxu0 0.0
  %1797 = vmatpush1.msra.mxu0 0.0
  %1798 = vmatprep.subr.mxu0 0.0
  %1799 = vmatpush1.msra.mxu0 0.0
  %1800 = vmatprep.subr.mxu0 0.0
  %1801 = vmatpush1.msra.mxu0 0.0
  %1802 = vmatprep.subr.mxu0 0.0
  %1803 = vmatpush1.msra.mxu0 0.0
  %1804 = vmatprep.subr.mxu0 0.0
  %1805 = vmatpush1.msra.mxu0 0.0
  %1806 = vmatprep.subr.mxu0 0.0
  %1807 = vmatpush1.msra.mxu0 0.0
  %1808 = vmatprep.subr.mxu0 0.0
  %1809 = vmatpush1.msra.mxu0 0.0
  %1810 = vmatprep.subr.mxu0 0.0
  %1811 = vmatpush1.msra.mxu0 0.0
  %1812 = vmatprep.subr.mxu0 0.0
  %1813 = vmatpush1.msra.mxu0 0.0
  %1814 = vmatprep.subr.mxu0 0.0
  %1815 = vmatpush1.msra.mxu0 0.0
  %1816 = vmatprep.subr.mxu0 0.0
  %1817 = vmatpush1.msra.mxu0 0.0
  %1818 = vmatprep.subr.mxu0 0.0
  %1819 = vmatpush1.msra.mxu0 0.0
  %1820 = vmatprep.mubr.f32.mxu0 0.0
  %1821 = vmatmul.mubr.f32.gmra.mrb[0].mxu0 %v1754
  %v1822 = vpop.f32.mrb[0].mxu0
  %v1823 = vadd.f32 0.0, %v1822
  %v1824 = vpop.f32.mrb[0].mxu0
  %1825 = vdwg.mxu0
  %v1826 = vadd.f32 %v1750, %v1823
  %v1827 = vxor.u32 %v1826, 2147483648
  %v1828 = vmul.f32 %v1827, 1.442695
  %v1829 = vpow.pop %v1828
  %v1830 = vadd.f32 %v1829, 1.0
  %v1831 = vrcp.pop %v1830
  %v1832 = vmul.f32 1.0, %v1831
  %v1833 = vmul.f32 %v1832, 2.0
  %v1834 = vsub.f32 %v1833, 1.0
  %v1835 = vmul.f32 %v1832, %v1742
  %1837 = vrot.lane.b32.xlu0 %v1834, 64
  %v1838 = vpop.permute.xlu0 %1837
  %v1840 = vmul.f32 %v1832, %v1838
  %1842 = vrot.lane.b32.xlu0 %v1840, 32
  %v1843 = vpop.permute.xlu0 %1842
  %v1845 = vadd.f32 %v1835, %v1843
  %v1846 = vtanh.pop %v1845
  %1848 = vrot.lane.b32.xlu0 %v1846, 64
  %v1849 = vpop.permute.xlu0 %1848
  %v1851 = vmul.f32 %v1832, %v1849
  %v1852 = vmul.f32 %v1851, %v1335
  %v1853 = vld [vmem:[#allocation3 + $0x30] sm:$0xff]
  %1855 = vrot.lane.b32.xlu0 %v1852, 32
  %v1856 = vpop.permute.xlu0 %1855
  %v1857 = vsel %vm325, %v1856, 0
  %1859 = vmatprep.subr.mxu0 0.0
  %1860 = vmatpush1.msra.mxu0 %v1232
  %1861 = vmatprep.subr.mxu0 0.0
  %1862 = vmatpush1.msra.mxu0 %v1233
  %1863 = vmatprep.subr.mxu0 0.0
  %1864 = vmatpush1.msra.mxu0 %v1234
  %1865 = vmatprep.subr.mxu0 0.0
  %1866 = vmatpush1.msra.mxu0 %v1235
  %1867 = vmatprep.subr.mxu0 0.0
  %1868 = vmatpush1.msra.mxu0 0.0
  %1869 = vmatprep.subr.mxu0 0.0
  %1870 = vmatpush1.msra.mxu0 0.0
  %1871 = vmatprep.subr.mxu0 0.0
  %1872 = vmatpush1.msra.mxu0 0.0
  %1873 = vmatprep.subr.mxu0 0.0
  %1874 = vmatpush1.msra.mxu0 0.0
  %1875 = vmatprep.subr.mxu0 0.0
  %1876 = vmatpush1.msra.mxu0 0.0
  %1877 = vmatprep.subr.mxu0 0.0
  %1878 = vmatpush1.msra.mxu0 0.0
  %1879 = vmatprep.subr.mxu0 0.0
  %1880 = vmatpush1.msra.mxu0 0.0
  %1881 = vmatprep.subr.mxu0 0.0
  %1882 = vmatpush1.msra.mxu0 0.0
  %1883 = vmatprep.subr.mxu0 0.0
  %1884 = vmatpush1.msra.mxu0 0.0
  %1885 = vmatprep.subr.mxu0 0.0
  %1886 = vmatpush1.msra.mxu0 0.0
  %1887 = vmatprep.subr.mxu0 0.0
  %1888 = vmatpush1.msra.mxu0 0.0
  %1889 = vmatprep.subr.mxu0 0.0
  %1890 = vmatpush1.msra.mxu0 0.0
  %1891 = vmatprep.subr.mxu0 0.0
  %1892 = vmatpush1.msra.mxu0 0.0
  %1893 = vmatprep.subr.mxu0 0.0
  %1894 = vmatpush1.msra.mxu0 0.0
  %1895 = vmatprep.subr.mxu0 0.0
  %1896 = vmatpush1.msra.mxu0 0.0
  %1897 = vmatprep.subr.mxu0 0.0
  %1898 = vmatpush1.msra.mxu0 0.0
  %1899 = vmatprep.subr.mxu0 0.0
  %1900 = vmatpush1.msra.mxu0 0.0
  %1901 = vmatprep.subr.mxu0 0.0
  %1902 = vmatpush1.msra.mxu0 0.0
  %1903 = vmatprep.subr.mxu0 0.0
  %1904 = vmatpush1.msra.mxu0 0.0
  %1905 = vmatprep.subr.mxu0 0.0
  %1906 = vmatpush1.msra.mxu0 0.0
  %1907 = vmatprep.subr.mxu0 0.0
  %1908 = vmatpush1.msra.mxu0 0.0
  %1909 = vmatprep.subr.mxu0 0.0
  %1910 = vmatpush1.msra.mxu0 0.0
  %1911 = vmatprep.subr.mxu0 0.0
  %1912 = vmatpush1.msra.mxu0 0.0
  %1913 = vmatprep.subr.mxu0 0.0
  %1914 = vmatpush1.msra.mxu0 0.0
  %1915 = vmatprep.subr.mxu0 0.0
  %1916 = vmatpush1.msra.mxu0 0.0
  %1917 = vmatprep.subr.mxu0 0.0
  %1918 = vmatpush1.msra.mxu0 0.0
  %1919 = vmatprep.subr.mxu0 0.0
  %1920 = vmatpush1.msra.mxu0 0.0
  %1921 = vmatprep.subr.mxu0 0.0
  %1922 = vmatpush1.msra.mxu0 0.0
  %1923 = vmatprep.mubr.f32.mxu0 0.0
  %1924 = vmatmul.mubr.f32.gmra.mrb[0].mxu0 %v1857
  %v1925 = vpop.f32.mrb[0].mxu0
  %v1926 = vadd.f32 0.0, %v1925
  %v1927 = vpop.f32.mrb[0].mxu0
  %1928 = vdwg.mxu0
  %v1929 = vadd.f32 %v1853, %v1926
  %v1930 = vxor.u32 %v1929, 2147483648
  %v1931 = vmul.f32 %v1930, 1.442695
  %v1932 = vpow.pop %v1931
  %v1933 = vadd.f32 %v1932, 1.0
  %v1934 = vrcp.pop %v1933
  %v1935 = vmul.f32 1.0, %v1934
  %v1936 = vmul.f32 %v1935, 2.0
  %v1937 = vsub.f32 %v1936, 1.0
  %v1938 = vmul.f32 %v1935, %v1845
  %1940 = vrot.lane.b32.xlu0 %v1937, 64
  %v1941 = vpop.permute.xlu0 %1940
  %v1943 = vmul.f32 %v1935, %v1941
  %1945 = vrot.lane.b32.xlu0 %v1943, 32
  %v1946 = vpop.permute.xlu0 %1945
  %v1948 = vadd.f32 %v1938, %v1946
  %v1949 = vtanh.pop %v1948
  %1951 = vrot.lane.b32.xlu0 %v1949, 64
  %v1952 = vpop.permute.xlu0 %1951
  %v1954 = vmul.f32 %v1935, %v1952
  %v1955 = vmul.f32 %v1954, %v1335
  %v1956 = vld [vmem:[#allocation3 + $0x38] sm:$0xff]
  %1958 = vrot.lane.b32.xlu0 %v1955, 32
  %v1959 = vpop.permute.xlu0 %1958
  %v1960 = vsel %vm325, %v1959, 0
  %1962 = vmatprep.subr.mxu0 0.0
  %1963 = vmatpush1.msra.mxu0 %v1232
  %1964 = vmatprep.subr.mxu0 0.0
  %1965 = vmatpush1.msra.mxu0 %v1233
  %1966 = vmatprep.subr.mxu0 0.0
  %1967 = vmatpush1.msra.mxu0 %v1234
  %1968 = vmatprep.subr.mxu0 0.0
  %1969 = vmatpush1.msra.mxu0 %v1235
  %1970 = vmatprep.subr.mxu0 0.0
  %1971 = vmatpush1.msra.mxu0 0.0
  %1972 = vmatprep.subr.mxu0 0.0
  %1973 = vmatpush1.msra.mxu0 0.0
  %1974 = vmatprep.subr.mxu0 0.0
  %1975 = vmatpush1.msra.mxu0 0.0
  %1976 = vmatprep.subr.mxu0 0.0
  %1977 = vmatpush1.msra.mxu0 0.0
  %1978 = vmatprep.subr.mxu0 0.0
  %1979 = vmatpush1.msra.mxu0 0.0
  %1980 = vmatprep.subr.mxu0 0.0
  %1981 = vmatpush1.msra.mxu0 0.0
  %1982 = vmatprep.subr.mxu0 0.0
  %1983 = vmatpush1.msra.mxu0 0.0
  %1984 = vmatprep.subr.mxu0 0.0
  %1985 = vmatpush1.msra.mxu0 0.0
  %1986 = vmatprep.subr.mxu0 0.0
  %1987 = vmatpush1.msra.mxu0 0.0
  %1988 = vmatprep.subr.mxu0 0.0
  %1989 = vmatpush1.msra.mxu0 0.0
  %1990 = vmatprep.subr.mxu0 0.0
  %1991 = vmatpush1.msra.mxu0 0.0
  %1992 = vmatprep.subr.mxu0 0.0
  %1993 = vmatpush1.msra.mxu0 0.0
  %1994 = vmatprep.subr.mxu0 0.0
  %1995 = vmatpush1.msra.mxu0 0.0
  %1996 = vmatprep.subr.mxu0 0.0
  %1997 = vmatpush1.msra.mxu0 0.0
  %1998 = vmatprep.subr.mxu0 0.0
  %1999 = vmatpush1.msra.mxu0 0.0
  %2000 = vmatprep.subr.mxu0 0.0
  %2001 = vmatpush1.msra.mxu0 0.0
  %2002 = vmatprep.subr.mxu0 0.0
  %2003 = vmatpush1.msra.mxu0 0.0
  %2004 = vmatprep.subr.mxu0 0.0
  %2005 = vmatpush1.msra.mxu0 0.0
  %2006 = vmatprep.subr.mxu0 0.0
  %2007 = vmatpush1.msra.mxu0 0.0
  %2008 = vmatprep.subr.mxu0 0.0
  %2009 = vmatpush1.msra.mxu0 0.0
  %2010 = vmatprep.subr.mxu0 0.0
  %2011 = vmatpush1.msra.mxu0 0.0
  %2012 = vmatprep.subr.mxu0 0.0
  %2013 = vmatpush1.msra.mxu0 0.0
  %2014 = vmatprep.subr.mxu0 0.0
  %2015 = vmatpush1.msra.mxu0 0.0
  %2016 = vmatprep.subr.mxu0 0.0
  %2017 = vmatpush1.msra.mxu0 0.0
  %2018 = vmatprep.subr.mxu0 0.0
  %2019 = vmatpush1.msra.mxu0 0.0
  %2020 = vmatprep.subr.mxu0 0.0
  %2021 = vmatpush1.msra.mxu0 0.0
  %2022 = vmatprep.subr.mxu0 0.0
  %2023 = vmatpush1.msra.mxu0 0.0
  %2024 = vmatprep.subr.mxu0 0.0
  %2025 = vmatpush1.msra.mxu0 0.0
  %2026 = vmatprep.mubr.f32.mxu0 0.0
  %2027 = vmatmul.mubr.f32.gmra.mrb[0].mxu0 %v1960
  %v2028 = vpop.f32.mrb[0].mxu0
  %v2029 = vadd.f32 0.0, %v2028
  %v2030 = vpop.f32.mrb[0].mxu0
  %2031 = vdwg.mxu0
  %v2032 = vadd.f32 %v1956, %v2029
  %v2033 = vxor.u32 %v2032, 2147483648
  %v2034 = vmul.f32 %v2033, 1.442695
  %v2035 = vpow.pop %v2034
  %v2036 = vadd.f32 %v2035, 1.0
  %v2037 = vrcp.pop %v2036
  %v2038 = vmul.f32 1.0, %v2037
  %v2039 = vmul.f32 %v2038, 2.0
  %v2040 = vsub.f32 %v2039, 1.0
  %v2041 = vmul.f32 %v2038, %v1948
  %2043 = vrot.lane.b32.xlu0 %v2040, 64
  %v2044 = vpop.permute.xlu0 %2043
  %v2046 = vmul.f32 %v2038, %v2044
  %2048 = vrot.lane.b32.xlu0 %v2046, 32
  %v2049 = vpop.permute.xlu0 %2048
  %v2051 = vadd.f32 %v2041, %v2049
  %v2052 = vtanh.pop %v2051
  %2054 = vrot.lane.b32.xlu0 %v2052, 64
  %v2055 = vpop.permute.xlu0 %2054
  %v2057 = vmul.f32 %v2038, %v2055
  %v2058 = vmul.f32 %v2057, %v1335
  %v2059 = vld [vmem:[%s9] sm:$0xff]
  %v2060 = vld [vmem:[%s9 + $0x8] sm:$0xff]
  %v2061 = vld [vmem:[%s9 + $0x10] sm:$0xff]
  %v2062 = vld [vmem:[%s9 + $0x18] sm:$0xff]
  %v2063 = vld [vmem:[%s10] sm:$0x1]
  %v2065 = vlaneseq
  %v2066 = vshrl.u32 %v2065, 7
  %v2067 = vsub.s32 0, %v2066
  %v2068 = vrot.slane %v2063, %v2067
  %2071 = vrot.lane.b32.xlu0 %v2058, 32
  %v2072 = vpop.permute.xlu0 %2071
  %v2073 = vsel %vm325, %v2072, 0
  %2075 = vmatprep.subr.mxu0 0.0
  %2076 = vmatpush1.msra.mxu0 %v2059
  %2077 = vmatprep.subr.mxu0 0.0
  %2078 = vmatpush1.msra.mxu0 %v2060
  %2079 = vmatprep.subr.mxu0 0.0
  %2080 = vmatpush1.msra.mxu0 %v2061
  %2081 = vmatprep.subr.mxu0 0.0
  %2082 = vmatpush1.msra.mxu0 %v2062
  %2083 = vmatprep.subr.mxu0 0.0
  %2084 = vmatpush1.msra.mxu0 0.0
  %2085 = vmatprep.subr.mxu0 0.0
  %2086 = vmatpush1.msra.mxu0 0.0
  %2087 = vmatprep.subr.mxu0 0.0
  %2088 = vmatpush1.msra.mxu0 0.0
  %2089 = vmatprep.subr.mxu0 0.0
  %2090 = vmatpush1.msra.mxu0 0.0
  %2091 = vmatprep.subr.mxu0 0.0
  %2092 = vmatpush1.msra.mxu0 0.0
  %2093 = vmatprep.subr.mxu0 0.0
  %2094 = vmatpush1.msra.mxu0 0.0
  %2095 = vmatprep.subr.mxu0 0.0
  %2096 = vmatpush1.msra.mxu0 0.0
  %2097 = vmatprep.subr.mxu0 0.0
  %2098 = vmatpush1.msra.mxu0 0.0
  %2099 = vmatprep.subr.mxu0 0.0
  %2100 = vmatpush1.msra.mxu0 0.0
  %2101 = vmatprep.subr.mxu0 0.0
  %2102 = vmatpush1.msra.mxu0 0.0
  %2103 = vmatprep.subr.mxu0 0.0
  %2104 = vmatpush1.msra.mxu0 0.0
  %2105 = vmatprep.subr.mxu0 0.0
  %2106 = vmatpush1.msra.mxu0 0.0
  %2107 = vmatprep.subr.mxu0 0.0
  %2108 = vmatpush1.msra.mxu0 0.0
  %2109 = vmatprep.subr.mxu0 0.0
  %2110 = vmatpush1.msra.mxu0 0.0
  %2111 = vmatprep.subr.mxu0 0.0
  %2112 = vmatpush1.msra.mxu0 0.0
  %2113 = vmatprep.subr.mxu0 0.0
  %2114 = vmatpush1.msra.mxu0 0.0
  %2115 = vmatprep.subr.mxu0 0.0
  %2116 = vmatpush1.msra.mxu0 0.0
  %2117 = vmatprep.subr.mxu0 0.0
  %2118 = vmatpush1.msra.mxu0 0.0
  %2119 = vmatprep.subr.mxu0 0.0
  %2120 = vmatpush1.msra.mxu0 0.0
  %2121 = vmatprep.subr.mxu0 0.0
  %2122 = vmatpush1.msra.mxu0 0.0
  %2123 = vmatprep.subr.mxu0 0.0
  %2124 = vmatpush1.msra.mxu0 0.0
  %2125 = vmatprep.subr.mxu0 0.0
  %2126 = vmatpush1.msra.mxu0 0.0
  %2127 = vmatprep.subr.mxu0 0.0
  %2128 = vmatpush1.msra.mxu0 0.0
  %2129 = vmatprep.subr.mxu0 0.0
  %2130 = vmatpush1.msra.mxu0 0.0
  %2131 = vmatprep.subr.mxu0 0.0
  %2132 = vmatpush1.msra.mxu0 0.0
  %2133 = vmatprep.subr.mxu0 0.0
  %2134 = vmatpush1.msra.mxu0 0.0
  %2135 = vmatprep.subr.mxu0 0.0
  %2136 = vmatpush1.msra.mxu0 0.0
  %2137 = vmatprep.subr.mxu0 0.0
  %2138 = vmatpush1.msra.mxu0 0.0
  %2139 = vmatprep.mubr.f32.mxu0 0.0
  %2140 = vmatmul.mubr.f32.gmra.mrb[0].mxu0 %v2073
  %v2141 = vpop.f32.mrb[0].mxu0
  %v2142 = vadd.f32 %v2068, %v2141
  %v2143 = vpop.f32.mrb[0].mxu0
  %2144 = vdwg.mxu0
  %2145 = vst [vmem:[%s11] sm:$0xff] %v2142
  // Predicated region
  $region46: #{dualnet_market_forward.1} parent=0 // pred_check
    _
  $region47: #{dualnet_market_forward.1} parent=0 // pred_check_branch
    %2147 = sbr.rel (0) target = $region49
  $region48: #{dualnet_market_forward.1} parent=0 // pred_region
    _
  $region49: #{dualnet_market_forward.1} parent=0 // pred_fallthru
    _
  // Predicated region
  $region50: #{dualnet_market_forward.1} parent=0 // pred_check
    _
  $region51: #{dualnet_market_forward.1} parent=0 // pred_check_branch
    %2149 = sbr.rel (0) target = $region53
  $region52: #{dualnet_market_forward.1} parent=0 // pred_region
    _
  $region53: #{dualnet_market_forward.1} parent=0 // pred_fallthru
    _

</llo_original>
